<compile_context>
chip_gen: v7x
topology: tpu7x:2x2x1
jax: 0.10.0
libtpu: 0.0.40
codegen_flags: <defaults>
</compile_context>

<pallas_src>
import functools

import jax
import jax.numpy as jnp
from jax.experimental import pallas as pl
from jax.experimental.pallas import tpu as pltpu


def _round_up(n, m):
    return ((n + m - 1) // m) * m


def _vmem_capacity_bytes():
    try:
        return int(pltpu.get_tpu_info().vmem_capacity_bytes)
    except Exception:
        return 64 * 1024 * 1024  # conservative (v7x per-TensorCore VMEM)


def _mlp_kernel(x_ref, w1_ref, b1_ref, w2_ref, b2_ref, h_ref, o_ref, *,
                approx_sigmoid):
    # In-kernel operand cast (no-op when dtypes already match): x stays in its
    # original dtype in HBM, so the wrapper never does a separate cast pass.
    x = x_ref[...].astype(w1_ref.dtype)

    # fc1 on the MXU with f32 accumulation, bias add in f32.
    z = jnp.dot(x, w1_ref[...], preferred_element_type=jnp.float32) + b1_ref[...]

    # sigmoid(z) = 1 / (1 + exp(-z)); exp on the EUP, reciprocal optionally on
    # the EUP too (approx) so the VALU slot stays free for the bias/cast work.
    e = jnp.exp(-z)
    if approx_sigmoid:
        h_f32 = pl.reciprocal(1.0 + e, approx=True)
    else:
        h_f32 = 1.0 / (1.0 + e)

    # Single cast of h to the fc2 operand dtype; reuse it for the stored h
    # when the output dtype matches (one cast per tile instead of two).
    h_op = h_f32.astype(w2_ref.dtype)
    if h_ref.dtype == w2_ref.dtype:
        h_ref[...] = h_op
    else:
        h_ref[...] = h_f32.astype(h_ref.dtype)

    # fc2 on the MXU with f32 accumulation, bias add in f32.
    o = jnp.dot(h_op, w2_ref[...], preferred_element_type=jnp.float32)
    o_ref[...] = (o + b2_ref[...]).astype(o_ref.dtype)


def _choose_batch_tile(b_rows, dims_in, dims_out, hidden,
                       x_item, cdt_item, out_item, budget_bytes):
    """Largest sublane-aligned batch tile whose double-buffered activation
    tiles + in-kernel f32 temporaries + resident weights fit the budget."""
    # Sublane-packing multiple of the narrowest row dtype (8 f32, 16 bf16).
    sub = max(32 // x_item, 32 // out_item, 8)

    # Double-buffered, batch-tiled operands (bytes per batch row).
    per_row = 2 * (dims_in * x_item + hidden * out_item + dims_out * out_item)
    # In-kernel temporaries (single copy): z/h_f32, h_op cast, o (f32), and the
    # x operand cast copy when compute dtype differs from x's storage dtype.
    per_row += hidden * 4 + hidden * cdt_item + dims_out * 4
    if cdt_item != x_item:
        per_row += dims_in * cdt_item

    # Resident weights/biases.  Budgeted double-buffered for safety even though
    # we request pl.Buffered(1) for them (fallback path keeps two buffers).
    weights = 2 * ((dims_in * hidden + hidden * dims_out) * cdt_item
                   + (hidden + dims_out) * 4)

    avail = max(budget_bytes - weights, per_row * sub)
    tb = max(sub, (int(avail // per_row) // sub) * sub)
    tb = min(tb, _round_up(b_rows, sub))
    if b_rows > sub:
        # >= 2 grid steps so dimension_semantics=("parallel",) can shard the
        # batch axis over both v7x TensorCores (negligible cost on v5e/v6e).
        tb = min(tb, _round_up((b_rows + 1) // 2, sub))
    return tb


def make_two_layer_mlp(w1, b1, w2, b2, *, compute_dtype=None, out_dtype=None,
                       approx_sigmoid=False):
    """Build a Pallas forward for two_layer_mlp.

    w1: (dims, 128), b1: (128,), w2: (128, dims), b2: (dims,) — weights stored
    transposed vs. torch.nn.Linear so the kernel computes plain x @ W + b.
    Weight casting/padding is done ONCE here (hoisted out of the hot path).
    compute_dtype (e.g. bf16) sets the MXU operand dtype (f32 accumulation);
    out_dtype sets the storage dtype of (h, x1) (defaults to x.dtype).
    Returns forward(x) -> (h, x1).
    """
    dims, hidden = w1.shape
    cdt = jnp.dtype(compute_dtype) if compute_dtype is not None else jnp.dtype(w1.dtype)

    # ---- one-time weight preparation (not repeated per forward call) ----
    lane_pad = (dims % 128) != 0
    dims_out = _round_up(dims, 128) if lane_pad else dims

    w1_p = w1.astype(cdt)                               # fc1 K dim needs no pad
    b1_p = b1.reshape(1, hidden).astype(jnp.float32)
    if lane_pad:
        # Pad only the fc2 output dim so x1 stores stay lane-dense; x and W1
        # stay unpadded (full-dim blocks are legal and avoid an extra x pass).
        w2_p = jnp.zeros((hidden, dims_out), cdt).at[:, :dims].set(w2.astype(cdt))
        b2_p = jnp.zeros((1, dims_out), jnp.float32).at[0, :dims].set(
            b2.astype(jnp.float32))
    else:
        w2_p = w2.astype(cdt)
        b2_p = b2.reshape(1, dims).astype(jnp.float32)

    # Generation-aware VMEM sizing (v5e/v6e: 128 MiB, v7x: 64 MiB per core).
    vmem_cap = _vmem_capacity_bytes()
    vmem_limit = int(vmem_cap * 0.75)
    budget = int(vmem_limit * 0.85)

    kernel = functools.partial(_mlp_kernel, approx_sigmoid=approx_sigmoid)

    def forward(x):
        assert x.ndim == 2 and x.shape[1] == dims, "expected x of shape (B, dims)"
        B = x.shape[0]
        odt = jnp.dtype(out_dtype) if out_dtype is not None else jnp.dtype(x.dtype)

        tb = _choose_batch_tile(B, dims, dims_out, hidden,
                                jnp.dtype(x.dtype).itemsize, cdt.itemsize,
                                odt.itemsize, budget)
        grid = (-(-B // tb),)  # ragged last block: Pallas masks OOB rows/writes

        cost = pl.CostEstimate(
            flops=2 * 2 * B * dims * hidden,
            transcendentals=B * hidden,
            bytes_accessed=(x.size * jnp.dtype(x.dtype).itemsize
                            + (w1_p.size + w2_p.size) * cdt.itemsize
                            + (b1_p.size + b2_p.size) * 4
                            + (B * hidden + B * dims_out) * odt.itemsize),
        )

        out_shape = (jax.ShapeDtypeStruct((B, hidden), odt),
                     jax.ShapeDtypeStruct((B, dims_out), odt))
        out_specs = (pl.BlockSpec((tb, hidden), lambda i: (i, 0)),
                     pl.BlockSpec((tb, dims_out), lambda i: (i, 0)))
        x_spec = pl.BlockSpec((tb, dims), lambda i: (i, 0))

        def call(resident_mode):
            def const(shape):
                if resident_mode is None:
                    return pl.BlockSpec(shape, lambda i: (0, 0))
                return pl.BlockSpec(shape, lambda i: (0, 0),
                                    pipeline_mode=resident_mode)

            return pl.pallas_call(
                kernel,
                out_shape=out_shape,
                grid=grid,
                in_specs=[
                    x_spec,                       # x tile (pipelined)
                    const((dims, hidden)),        # W1 (VMEM-resident)
                    const((1, hidden)),           # b1 (resident)
                    const((hidden, dims_out)),    # W2 (resident)
                    const((1, dims_out)),         # b2 (resident)
                ],
                out_specs=out_specs,
                compiler_params=pltpu.CompilerParams(
                    dimension_semantics=("parallel",),  # megacore shard on v7x
                    vmem_limit_bytes=vmem_limit,
                ),
                cost_estimate=cost,
            )(x, w1_p, b1_p, w2_p, b2_p)

        try:
            # Grid-invariant operands: single VMEM buffer (no double-buffering).
            h, x1 = call(pl.Buffered(1))
        except Exception:
            # Older JAX without pipeline_mode / Buffered(1): default buffering.
            h, x1 = call(None)

        if lane_pad:
            x1 = x1[:, :dims]
        return h, x1

    return forward


def init_params(key, dims, hidden=128, dtype=jnp.float32):
    # Deterministic init mimicking nn.Linear default (uniform +/- 1/sqrt(fan_in)).
    k1, k2, k3, k4 = jax.random.split(key, 4)
    lim1 = 1.0 / jnp.sqrt(dims)
    lim2 = 1.0 / jnp.sqrt(hidden)
    w1 = jax.random.uniform(k1, (dims, hidden), dtype, -lim1, lim1)
    b1 = jax.random.uniform(k2, (hidden,), dtype, -lim1, lim1)
    w2 = jax.random.uniform(k3, (hidden, dims), dtype, -lim2, lim2)
    b2 = jax.random.uniform(k4, (dims,), dtype, -lim2, lim2)
    return w1, b1, w2, b2


if __name__ == "__main__":
    key = jax.random.PRNGKey(0)
    kx1, kx2, kp1, kp2 = jax.random.split(key, 4)

    # Case 1: dims=64 (not a multiple of 128) -> padded-W2 fallback path and a
    # ragged last batch block (B=20, TB=16 -> grid=(2,)).  f32 operands.
    B, dims = 20, 64
    x = jax.random.normal(kx1, (B, dims), jnp.float32)
    w1, b1, w2, b2 = init_params(kp1, dims)
    h_ref = jax.nn.sigmoid(x @ w1 + b1)
    x1_ref = h_ref @ w2 + b2

    fwd = make_two_layer_mlp(w1, b1, w2, b2)
    h, x1 = fwd(x)
    jax.block_until_ready((h, x1))
    assert h.shape == (B, 128) and x1.shape == (B, dims)
    # Tolerance covers the MXU's f32 matmul lowering regardless of pass count.
    assert jnp.allclose(h, h_ref, atol=2e-2, rtol=2e-2), "fc1/sigmoid mismatch (f32)"
    assert jnp.allclose(x1, x1_ref, atol=2e-2, rtol=2e-2), "fc2 mismatch (f32)"

    # Case 2: dims=128 (multiple of 128) -> zero-pad / zero-slice fast path,
    # bf16 MXU operands (f32 accumulation), EUP approx sigmoid.
    B2, dims2 = 24, 128
    x2 = jax.random.normal(kx2, (B2, dims2), jnp.float32)
    w1b, b1b, w2b, b2b = init_params(kp2, dims2)
    h2_ref = jax.nn.sigmoid(x2 @ w1b + b1b)
    x12_ref = h2_ref @ w2b + b2b

    fwd_bf16 = make_two_layer_mlp(w1b, b1b, w2b, b2b,
                                  compute_dtype=jnp.bfloat16,
                                  approx_sigmoid=True)
    h2, x12 = fwd_bf16(x2)
    jax.block_until_ready((h2, x12))
    assert h2.shape == (B2, 128) and x12.shape == (B2, dims2)
    assert jnp.allclose(h2, h2_ref, atol=5e-2, rtol=5e-2), "fc1 mismatch (bf16)"
    assert jnp.allclose(x12, x12_ref, atol=5e-2, rtol=5e-2), "fc2 mismatch (bf16)"

    print("KERNEL_OK")
</pallas_src>

<mosaic_0001>
module attributes {stable_mosaic.version = 11 : i64} {
  func.func @_mlp_kernel(%arg0: i32, %arg1: memref<16x64xf32, #tpu.memory_space<vmem>>, %arg2: memref<64x128xf32, #tpu.memory_space<vmem>>, %arg3: memref<1x128xf32, #tpu.memory_space<vmem>>, %arg4: memref<128x128xf32, #tpu.memory_space<vmem>>, %arg5: memref<1x128xf32, #tpu.memory_space<vmem>>, %arg6: memref<16x128xf32, #tpu.memory_space<vmem>>, %arg7: memref<16x128xf32, #tpu.memory_space<vmem>>) attributes {dimension_semantics = [#tpu.dimension_semantics<parallel>], iteration_bounds = array<i64: 2>, scalar_prefetch = 0 : i64, scratch_operands = 0 : i64, tpu.core_type = #tpu.core_type<tc>, window_params = [{transform_indices = @transform_0, window_bounds = array<i64: 16, 64>}, {pipeline_mode = #tpu.pipeline_mode<synchronous>, transform_indices = @transform_1, window_bounds = array<i64: 64, 128>}, {pipeline_mode = #tpu.pipeline_mode<synchronous>, transform_indices = @transform_2, window_bounds = array<i64: 1, 128>}, {pipeline_mode = #tpu.pipeline_mode<synchronous>, transform_indices = @transform_3, window_bounds = array<i64: 128, 128>}, {pipeline_mode = #tpu.pipeline_mode<synchronous>, transform_indices = @transform_4, window_bounds = array<i64: 1, 128>}, {transform_indices = @transform_5, window_bounds = array<i64: 16, 128>}, {transform_indices = @transform_6, window_bounds = array<i64: 16, 128>}]} {
    %c0 = arith.constant 0 : index
    %c0_0 = arith.constant 0 : index
    %0 = vector.load %arg1[%c0, %c0_0] : memref<16x64xf32, #tpu.memory_space<vmem>>, vector<16x64xf32>
    %c0_1 = arith.constant 0 : index
    %c0_2 = arith.constant 0 : index
    %1 = vector.load %arg2[%c0_1, %c0_2] : memref<64x128xf32, #tpu.memory_space<vmem>>, vector<64x128xf32>
    %cst = arith.constant dense<0.000000e+00> : vector<16x128xf32>
    %2 = tpu.matmul %0, %1, %cst {dimension_numbers = #tpu.dot_dimension_numbers<[1], [0], [0], [1], [0, 0, 1, 1], [], []>} : vector<16x64xf32>, vector<64x128xf32>, vector<16x128xf32> -> vector<16x128xf32>
    %c0_3 = arith.constant 0 : index
    %c0_4 = arith.constant 0 : index
    %3 = vector.load %arg3[%c0_3, %c0_4] : memref<1x128xf32, #tpu.memory_space<vmem>>, vector<1x128xf32>
    %4 = vector.broadcast %3 : vector<1x128xf32> to vector<16x128xf32>
    %5 = arith.addf %2, %4 : vector<16x128xf32>
    %cst_5 = arith.constant 0.000000e+00 : f32
    %6 = vector.broadcast %cst_5 : f32 to vector<16x128xf32>
    %7 = arith.subf %6, %5 : vector<16x128xf32>
    %8 = math.exp %7 : vector<16x128xf32>
    %cst_6 = arith.constant 1.000000e+00 : f32
    %9 = vector.broadcast %cst_6 : f32 to vector<16x128xf32>
    %10 = arith.addf %9, %8 : vector<16x128xf32>
    %cst_7 = arith.constant 1.000000e+00 : f32
    %11 = vector.broadcast %cst_7 : f32 to vector<16x128xf32>
    %12 = arith.divf %11, %10 : vector<16x128xf32>
    %c0_8 = arith.constant 0 : index
    %c0_9 = arith.constant 0 : index
    %13 = vector.load %arg6[%c0_8, %c0_9] : memref<16x128xf32, #tpu.memory_space<vmem>>, vector<16x128xf32>
    tpu.vector_store %arg6[%c0_8, %c0_9], %12 {strides = array<i32>} : memref<16x128xf32, #tpu.memory_space<vmem>>, vector<16x128xf32>,
    %c0_10 = arith.constant 0 : index
    %c0_11 = arith.constant 0 : index
    %14 = vector.load %arg4[%c0_10, %c0_11] : memref<128x128xf32, #tpu.memory_space<vmem>>, vector<128x128xf32>
    %cst_12 = arith.constant dense<0.000000e+00> : vector<16x128xf32>
    %15 = tpu.matmul %12, %14, %cst_12 {dimension_numbers = #tpu.dot_dimension_numbers<[1], [0], [0], [1], [0, 0, 1, 1], [], []>} : vector<16x128xf32>, vector<128x128xf32>, vector<16x128xf32> -> vector<16x128xf32>
    %c0_13 = arith.constant 0 : index
    %c0_14 = arith.constant 0 : index
    %16 = vector.load %arg5[%c0_13, %c0_14] : memref<1x128xf32, #tpu.memory_space<vmem>>, vector<1x128xf32>
    %17 = vector.broadcast %16 : vector<1x128xf32> to vector<16x128xf32>
    %18 = arith.addf %15, %17 : vector<16x128xf32>
    %c0_15 = arith.constant 0 : index
    %c0_16 = arith.constant 0 : index
    %19 = vector.load %arg7[%c0_15, %c0_16] : memref<16x128xf32, #tpu.memory_space<vmem>>, vector<16x128xf32>
    tpu.vector_store %arg7[%c0_15, %c0_16], %18 {strides = array<i32>} : memref<16x128xf32, #tpu.memory_space<vmem>>, vector<16x128xf32>,
    return
  }
  func.func @transform_0(%arg0: i32) -> (i32, i32) {
    %c0_i32 = arith.constant 0 : i32
    %c0_i32_0 = arith.constant 0 : i32
    return %arg0, %c0_i32 : i32, i32
  }
  func.func @transform_1(%arg0: i32) -> (i32, i32) {
    %c0_i32 = arith.constant 0 : i32
    %c0_i32_0 = arith.constant 0 : i32
    %c0_i32_1 = arith.constant 0 : i32
    return %c0_i32, %c0_i32_0 : i32, i32
  }
  func.func @transform_2(%arg0: i32) -> (i32, i32) {
    %c0_i32 = arith.constant 0 : i32
    %c0_i32_0 = arith.constant 0 : i32
    %c0_i32_1 = arith.constant 0 : i32
    return %c0_i32, %c0_i32_0 : i32, i32
  }
  func.func @transform_3(%arg0: i32) -> (i32, i32) {
    %c0_i32 = arith.constant 0 : i32
    %c0_i32_0 = arith.constant 0 : i32
    %c0_i32_1 = arith.constant 0 : i32
    return %c0_i32, %c0_i32_0 : i32, i32
  }
  func.func @transform_4(%arg0: i32) -> (i32, i32) {
    %c0_i32 = arith.constant 0 : i32
    %c0_i32_0 = arith.constant 0 : i32
    %c0_i32_1 = arith.constant 0 : i32
    return %c0_i32, %c0_i32_0 : i32, i32
  }
  func.func @transform_5(%arg0: i32) -> (i32, i32) {
    %c0_i32 = arith.constant 0 : i32
    %c0_i32_0 = arith.constant 0 : i32
    return %arg0, %c0_i32 : i32, i32
  }
  func.func @transform_6(%arg0: i32) -> (i32, i32) {
    %c0_i32 = arith.constant 0 : i32
    %c0_i32_0 = arith.constant 0 : i32
    return %arg0, %c0_i32 : i32, i32
  }
}

module attributes {stable_mosaic.version = 11 : i64} {
  func.func @_mlp_kernel(%arg0: i32, %arg1: memref<16x64xf32, #tpu.memory_space<vmem>>, %arg2: memref<64x128xf32, #tpu.memory_space<vmem>>, %arg3: memref<1x128xf32, #tpu.memory_space<vmem>>, %arg4: memref<128x128xf32, #tpu.memory_space<vmem>>, %arg5: memref<1x128xf32, #tpu.memory_space<vmem>>, %arg6: memref<16x128xf32, #tpu.memory_space<vmem>>, %arg7: memref<16x128xf32, #tpu.memory_space<vmem>>) attributes {dimension_semantics = [#tpu.dimension_semantics<parallel>], iteration_bounds = array<i64: 2>, scalar_prefetch = 0 : i64, scratch_operands = 0 : i64, tpu.core_type = #tpu.core_type<tc>, window_params = [{transform_indices = @transform_0, window_bounds = array<i64: 16, 64>}, {pipeline_mode = #tpu.pipeline_mode<synchronous>, transform_indices = @transform_1, window_bounds = array<i64: 64, 128>}, {pipeline_mode = #tpu.pipeline_mode<synchronous>, transform_indices = @transform_2, window_bounds = array<i64: 1, 128>}, {pipeline_mode = #tpu.pipeline_mode<synchronous>, transform_indices = @transform_3, window_bounds = array<i64: 128, 128>}, {pipeline_mode = #tpu.pipeline_mode<synchronous>, transform_indices = @transform_4, window_bounds = array<i64: 1, 128>}, {transform_indices = @transform_5, window_bounds = array<i64: 16, 128>}, {transform_indices = @transform_6, window_bounds = array<i64: 16, 128>}]} {
    %c0 = arith.constant 0 : index
    %c0_0 = arith.constant 0 : index
    %0 = vector.load %arg1[%c0, %c0_0] : memref<16x64xf32, #tpu.memory_space<vmem>>, vector<16x64xf32>
    %c0_1 = arith.constant 0 : index
    %c0_2 = arith.constant 0 : index
    %1 = vector.load %arg2[%c0_1, %c0_2] : memref<64x128xf32, #tpu.memory_space<vmem>>, vector<64x128xf32>
    %cst = arith.constant dense<0.000000e+00> : vector<16x128xf32>
    %2 = tpu.matmul %0, %1, %cst {dimension_numbers = #tpu.dot_dimension_numbers<[1], [0], [0], [1], [0, 0, 1, 1], [], []>} : vector<16x64xf32>, vector<64x128xf32>, vector<16x128xf32> -> vector<16x128xf32>
    %c0_3 = arith.constant 0 : index
    %c0_4 = arith.constant 0 : index
    %3 = vector.load %arg3[%c0_3, %c0_4] : memref<1x128xf32, #tpu.memory_space<vmem>>, vector<1x128xf32>
    %4 = vector.broadcast %3 : vector<1x128xf32> to vector<16x128xf32>
    %5 = arith.addf %2, %4 : vector<16x128xf32>
    %cst_5 = arith.constant 0.000000e+00 : f32
    %6 = vector.broadcast %cst_5 : f32 to vector<16x128xf32>
    %7 = arith.subf %6, %5 : vector<16x128xf32>
    %8 = math.exp %7 : vector<16x128xf32>
    %cst_6 = arith.constant 1.000000e+00 : f32
    %9 = vector.broadcast %cst_6 : f32 to vector<16x128xf32>
    %10 = arith.addf %9, %8 : vector<16x128xf32>
    %cst_7 = arith.constant 1.000000e+00 : f32
    %11 = vector.broadcast %cst_7 : f32 to vector<16x128xf32>
    %12 = arith.divf %11, %10 : vector<16x128xf32>
    %c0_8 = arith.constant 0 : index
    %c0_9 = arith.constant 0 : index
    %13 = vector.load %arg6[%c0_8, %c0_9] : memref<16x128xf32, #tpu.memory_space<vmem>>, vector<16x128xf32>
    tpu.vector_store %arg6[%c0_8, %c0_9], %12 {strides = array<i32>} : memref<16x128xf32, #tpu.memory_space<vmem>>, vector<16x128xf32>,
    %c0_10 = arith.constant 0 : index
    %c0_11 = arith.constant 0 : index
    %14 = vector.load %arg4[%c0_10, %c0_11] : memref<128x128xf32, #tpu.memory_space<vmem>>, vector<128x128xf32>
    %cst_12 = arith.constant dense<0.000000e+00> : vector<16x128xf32>
    %15 = tpu.matmul %12, %14, %cst_12 {dimension_numbers = #tpu.dot_dimension_numbers<[1], [0], [0], [1], [0, 0, 1, 1], [], []>} : vector<16x128xf32>, vector<128x128xf32>, vector<16x128xf32> -> vector<16x128xf32>
    %c0_13 = arith.constant 0 : index
    %c0_14 = arith.constant 0 : index
    %16 = vector.load %arg5[%c0_13, %c0_14] : memref<1x128xf32, #tpu.memory_space<vmem>>, vector<1x128xf32>
    %17 = vector.broadcast %16 : vector<1x128xf32> to vector<16x128xf32>
    %18 = arith.addf %15, %17 : vector<16x128xf32>
    %c0_15 = arith.constant 0 : index
    %c0_16 = arith.constant 0 : index
    %19 = vector.load %arg7[%c0_15, %c0_16] : memref<16x128xf32, #tpu.memory_space<vmem>>, vector<16x128xf32>
    tpu.vector_store %arg7[%c0_15, %c0_16], %18 {strides = array<i32>} : memref<16x128xf32, #tpu.memory_space<vmem>>, vector<16x128xf32>,
    return
  }
  func.func @transform_0(%arg0: i32) -> (i32, i32) {
    %c0_i32 = arith.constant 0 : i32
    %c0_i32_0 = arith.constant 0 : i32
    return %arg0, %c0_i32 : i32, i32
  }
  func.func @transform_1(%arg0: i32) -> (i32, i32) {
    %c0_i32 = arith.constant 0 : i32
    %c0_i32_0 = arith.constant 0 : i32
    %c0_i32_1 = arith.constant 0 : i32
    return %c0_i32, %c0_i32_0 : i32, i32
  }
  func.func @transform_2(%arg0: i32) -> (i32, i32) {
    %c0_i32 = arith.constant 0 : i32
    %c0_i32_0 = arith.constant 0 : i32
    %c0_i32_1 = arith.constant 0 : i32
    return %c0_i32, %c0_i32_0 : i32, i32
  }
  func.func @transform_3(%arg0: i32) -> (i32, i32) {
    %c0_i32 = arith.constant 0 : i32
    %c0_i32_0 = arith.constant 0 : i32
    %c0_i32_1 = arith.constant 0 : i32
    return %c0_i32, %c0_i32_0 : i32, i32
  }
  func.func @transform_4(%arg0: i32) -> (i32, i32) {
    %c0_i32 = arith.constant 0 : i32
    %c0_i32_0 = arith.constant 0 : i32
    %c0_i32_1 = arith.constant 0 : i32
    return %c0_i32, %c0_i32_0 : i32, i32
  }
  func.func @transform_5(%arg0: i32) -> (i32, i32) {
    %c0_i32 = arith.constant 0 : i32
    %c0_i32_0 = arith.constant 0 : i32
    return %arg0, %c0_i32 : i32, i32
  }
  func.func @transform_6(%arg0: i32) -> (i32, i32) {
    %c0_i32 = arith.constant 0 : i32
    %c0_i32_0 = arith.constant 0 : i32
    return %arg0, %c0_i32 : i32, i32
  }
}

</mosaic_0001>

<llo_original>
// kernel: tpu_custom_call.1
$region0: #{tpu_custom_call.1}
  #allocation0 [shape = 'u32[]', space=smem, size = 0x4, offset = 0x4, fixed_abs, tag = 'smem constant byte address 0x4 - core index']
  #allocation1 [shape = 'u32[144,128]{1,0:T(1,128)}', space=vmem, size = 0x12000, scoped, tag = 'internal scratch']
  %s0 = inlined_call_operand.hbm [shape: f32[20,64], index: 0, kind: input, shape index: {}]
  %s1 = inlined_call_operand.hbm [shape: f32[64,128], index: 1, kind: input, shape index: {}]
  %s2 = inlined_call_operand.vmem [shape: f32[1,128], index: 2, kind: input, shape index: {}]
  %s3 = inlined_call_operand.hbm [shape: f32[128,128], index: 3, kind: input, shape index: {}]
  %s4 = inlined_call_operand.vmem [shape: f32[1,128], index: 4, kind: input, shape index: {}]
  %s5 = inlined_call_operand.hbm [shape: f32[20,128], index: 5, kind: output, shape index: {0}]
  %s6 = inlined_call_operand.hbm [shape: f32[20,128], index: 6, kind: output, shape index: {1}]
  %7 = xla_tuple %s5, %s6
  %s8 = sld [smem:[#allocation0]]
  $region73: #{tpu_custom_call.1} parent=0
    _
  %s10 = ssub.s32 1, %s8
  %s11 = scalar_select 0, %s10, %s8
  $region1: #{tpu_custom_call.1} parent=0
    #allocation2 [shape = 'u8[16384]{0}', space=vmem, size = 0x4000, scoped, tag = 'input window, operand 0']
    #allocation3 [shape = 's32[2]{0}', space=sflag, size = 0x8, scoped, tag = 'scoped memory for tpu_custom_call.1']
    #allocation4 [shape = 's32[2]{0}', space=sflag, size = 0x8, scoped, tag = 'scoped memory for tpu_custom_call.1']
    #allocation5 [shape = 'u8[32768]{0}', space=vmem, size = 0x8000, scoped, tag = 'input window, operand 1, single buffered']
    #allocation6 [shape = 's32[1]{0}', space=sflag, size = 0x4, scoped, tag = 'scoped memory for tpu_custom_call.1']
    #allocation7 [shape = 'u8[65536]{0}', space=vmem, size = 0x10000, scoped, tag = 'input window, operand 3, single buffered']
    #allocation8 [shape = 'u8[16384]{0}', space=vmem, size = 0x4000, scoped, tag = 'output window, operand 0']
    #allocation9 [shape = 'u8[16384]{0}', space=vmem, size = 0x4000, scoped, tag = 'output window, operand 1']
    #allocation10 [shape = 's32[2]{0}', space=sflag, size = 0x8, scoped, tag = 'scoped memory for tpu_custom_call.1']
    %12 = vsyncpa [#allocation3], 0
    %s13 = scalar_lea.sflag [#allocation3], 1
    %14 = vsyncpa %s13, 0
    %15 = vsyncpa [#allocation6], 0
    %16 = vsyncpa [#allocation4], 0
    %s17 = scalar_lea.sflag [#allocation4], 1
    %18 = vsyncpa %s17, 0
    %19 = vsyncpa [#allocation10], 0
    %s20 = scalar_lea.sflag [#allocation10], 1
    %21 = vsyncpa %s20, 0
    loop: start=0, step=1, limit=4
    $region2: #{tpu_custom_call.1} parent=1 // loop_pre_header
      _
    $region3: #{tpu_custom_call.1} parent=1 // loop_header
      %s23 = sphi 0, %s27
      %p24 = scmp.ge.s32.totalorder %s23, 4
      %s33 = sphi 0, %s35
      %s36 = sphi 0, %s33
      %s37 = sphi 0, %s36
      %s53 = sphi 0, %s37
      %s57 = sphi 0, %s57
      %s59 = sphi 0, %s57
      %s60 = sphi 0, %s59
      %s74 = sphi 0, %s60
      %s78 = sphi 0, %s78
      %s80 = sphi 0, %s78
      %s81 = sphi 0, %s80
      %s95 = sphi 0, %s81
      %s99 = sphi 0, %s99
      %s101 = sphi 0, %s99
      %s102 = sphi 0, %s101
      %s116 = sphi 0, %s102
      %s120 = sphi 0, %s120
      %s122 = sphi 0, %s120
      %s123 = sphi 0, %s122
      %s137 = sphi 0, %s123
      %s143 = sphi 0, %s145
      %s146 = sphi 0, %s143
      %s147 = sphi 0, %s146
      %s163 = sphi 0, %s147
      %s169 = sphi 0, %s171
      %s172 = sphi 0, %s169
      %s173 = sphi 0, %s172
      %s189 = sphi 0, %s173
    $region4: #{tpu_custom_call.1} parent=1 // loop_header_branch
      %26 = sbr.rel (%p24) target = $region8
    $region5: #{tpu_custom_call.1} parent=1 // loop_body
      %s28 = ssub.s32 %s23, 1
      %s29 = ssub.s32 %s23, 2
      %s30 = sadd.s32 %s23, 1
      %s31 = ssub.s32 %s23, %s30
      %p32 = scmp.eq.s32.totalorder %s31, 0
      %s34 = sadd.s32 %s33, 1
      %s35 = scalar_select %p32, %s33, %s34
      %p38 = pneg %p32
      %p39 = scmp.eq.s32.totalorder %s23, 1
      %p40 = por %p38, %p39
      %p41 = scmp.ne.s32.totalorder %s33, %s36
      %p42 = scmp.eq.s32.totalorder %s23, 0
      %p43 = por %p41, %p42
      %p44 = scmp.ne.s32.totalorder %s33, %s36
      %p45 = scmp.eq.s32.totalorder %s28, 1
      %p46 = por %p44, %p45
      %p47 = scmp.ne.s32.totalorder %s36, %s37
      %p48 = scmp.eq.s32.totalorder %s28, 0
      %p49 = por %p47, %p48
      %p50 = scmp.ne.s32.totalorder %s36, %s37
      %p51 = scmp.eq.s32.totalorder %s29, 1
      %p52 = por %p50, %p51
      %p54 = scmp.ne.s32.totalorder %s37, %s53
      %p55 = scmp.eq.s32.totalorder %s29, 0
      %p56 = por %p54, %p55
      %s58 = sadd.s32 %s57, 1
      %p61 = scmp.eq.s32.totalorder %s23, 1
      %p62 = scmp.ne.s32.totalorder %s57, %s59
      %p63 = scmp.eq.s32.totalorder %s23, 0
      %p64 = por %p62, %p63
      %p65 = scmp.ne.s32.totalorder %s57, %s59
      %p66 = scmp.eq.s32.totalorder %s28, 1
      %p67 = por %p65, %p66
      %p68 = scmp.ne.s32.totalorder %s59, %s60
      %p69 = scmp.eq.s32.totalorder %s28, 0
      %p70 = por %p68, %p69
      %p71 = scmp.ne.s32.totalorder %s59, %s60
      %p72 = scmp.eq.s32.totalorder %s29, 1
      %p73 = por %p71, %p72
      %p75 = scmp.ne.s32.totalorder %s60, %s74
      %p76 = scmp.eq.s32.totalorder %s29, 0
      %p77 = por %p75, %p76
      %s79 = sadd.s32 %s78, 1
      %p82 = scmp.eq.s32.totalorder %s23, 1
      %p83 = scmp.ne.s32.totalorder %s78, %s80
      %p84 = scmp.eq.s32.totalorder %s23, 0
      %p85 = por %p83, %p84
      %p86 = scmp.ne.s32.totalorder %s78, %s80
      %p87 = scmp.eq.s32.totalorder %s28, 1
      %p88 = por %p86, %p87
      %p89 = scmp.ne.s32.totalorder %s80, %s81
      %p90 = scmp.eq.s32.totalorder %s28, 0
      %p91 = por %p89, %p90
      %p92 = scmp.ne.s32.totalorder %s80, %s81
      %p93 = scmp.eq.s32.totalorder %s29, 1
      %p94 = por %p92, %p93
      %p96 = scmp.ne.s32.totalorder %s81, %s95
      %p97 = scmp.eq.s32.totalorder %s29, 0
      %p98 = por %p96, %p97
      %s100 = sadd.s32 %s99, 1
      %p103 = scmp.eq.s32.totalorder %s23, 1
      %p104 = scmp.ne.s32.totalorder %s99, %s101
      %p105 = scmp.eq.s32.totalorder %s23, 0
      %p106 = por %p104, %p105
      %p107 = scmp.ne.s32.totalorder %s99, %s101
      %p108 = scmp.eq.s32.totalorder %s28, 1
      %p109 = por %p107, %p108
      %p110 = scmp.ne.s32.totalorder %s101, %s102
      %p111 = scmp.eq.s32.totalorder %s28, 0
      %p112 = por %p110, %p111
      %p113 = scmp.ne.s32.totalorder %s101, %s102
      %p114 = scmp.eq.s32.totalorder %s29, 1
      %p115 = por %p113, %p114
      %p117 = scmp.ne.s32.totalorder %s102, %s116
      %p118 = scmp.eq.s32.totalorder %s29, 0
      %p119 = por %p117, %p118
      %s121 = sadd.s32 %s120, 1
      %p124 = scmp.eq.s32.totalorder %s23, 1
      %p125 = scmp.ne.s32.totalorder %s120, %s122
      %p126 = scmp.eq.s32.totalorder %s23, 0
      %p127 = por %p125, %p126
      %p128 = scmp.ne.s32.totalorder %s120, %s122
      %p129 = scmp.eq.s32.totalorder %s28, 1
      %p130 = por %p128, %p129
      %p131 = scmp.ne.s32.totalorder %s122, %s123
      %p132 = scmp.eq.s32.totalorder %s28, 0
      %p133 = por %p131, %p132
      %p134 = scmp.ne.s32.totalorder %s122, %s123
      %p135 = scmp.eq.s32.totalorder %s29, 1
      %p136 = por %p134, %p135
      %p138 = scmp.ne.s32.totalorder %s123, %s137
      %p139 = scmp.eq.s32.totalorder %s29, 0
      %p140 = por %p138, %p139
      %s141 = ssub.s32 %s23, %s30
      %p142 = scmp.eq.s32.totalorder %s141, 0
      %s144 = sadd.s32 %s143, 1
      %s145 = scalar_select %p142, %s143, %s144
      %p148 = pneg %p142
      %p149 = scmp.eq.s32.totalorder %s23, 1
      %p150 = por %p148, %p149
      %p151 = scmp.ne.s32.totalorder %s143, %s146
      %p152 = scmp.eq.s32.totalorder %s23, 0
      %p153 = por %p151, %p152
      %p154 = scmp.ne.s32.totalorder %s143, %s146
      %p155 = scmp.eq.s32.totalorder %s28, 1
      %p156 = por %p154, %p155
      %p157 = scmp.ne.s32.totalorder %s146, %s147
      %p158 = scmp.eq.s32.totalorder %s28, 0
      %p159 = por %p157, %p158
      %p160 = scmp.ne.s32.totalorder %s146, %s147
      %p161 = scmp.eq.s32.totalorder %s29, 1
      %p162 = por %p160, %p161
      %p164 = scmp.ne.s32.totalorder %s147, %s163
      %p165 = scmp.eq.s32.totalorder %s29, 0
      %p166 = por %p164, %p165
      %s167 = ssub.s32 %s23, %s30
      %p168 = scmp.eq.s32.totalorder %s167, 0
      %s170 = sadd.s32 %s169, 1
      %s171 = scalar_select %p168, %s169, %s170
      %p174 = pneg %p168
      %p175 = scmp.eq.s32.totalorder %s23, 1
      %p176 = por %p174, %p175
      %p177 = scmp.ne.s32.totalorder %s169, %s172
      %p178 = scmp.eq.s32.totalorder %s23, 0
      %p179 = por %p177, %p178
      %p180 = scmp.ne.s32.totalorder %s169, %s172
      %p181 = scmp.eq.s32.totalorder %s28, 1
      %p182 = por %p180, %p181
      %p183 = scmp.ne.s32.totalorder %s172, %s173
      %p184 = scmp.eq.s32.totalorder %s28, 0
      %p185 = por %p183, %p184
      %p186 = scmp.ne.s32.totalorder %s172, %s173
      %p187 = scmp.eq.s32.totalorder %s29, 1
      %p188 = por %p186, %p187
      %p190 = scmp.ne.s32.totalorder %s173, %s189
      %p191 = scmp.eq.s32.totalorder %s29, 0
      %p192 = por %p190, %p191
      %p193 = scmp.le.s32.totalorder 1, %s23
      %p194 = scmp.lt.s32.totalorder %s23, 3
      %p195 = pnand %p193, %p194
      %p196 = pneg %p195
      // Predicated region
      $region9: #{tpu_custom_call.1} parent=5 // pred_check
        _
      $region10: #{tpu_custom_call.1} parent=5 // pred_check_branch
        %198 = sbr.rel (%p195) target = $region12
      $region11: #{tpu_custom_call.1} parent=5 // pred_region
        %s199 = ssub.s32 %s23, 1
        // Predicated region
        $region13: #{tpu_custom_call.1} parent=11 // pred_check
          %p200 = pneg %p70
        $region14: #{tpu_custom_call.1} parent=11 // pred_check_branch
          %202 = sbr.rel (%p200) target = $region16
        $region15: #{tpu_custom_call.1} parent=11 // pred_region
          %s204 = ssub.s32 1024, 1024
          %205 = vsyncadd [#allocation6], %s204
          %s206 = sshll.u32 [#allocation5], 4
          %s207 = int_to_ptr.vmem [resolvable:$true] %s206
          %212 = dma.hbm_to_vmem [thread:$0]  %s1, 1024, %s207, [#allocation6], 128, 128, 8
        $region16: #{tpu_custom_call.1} parent=11 // pred_fallthru
          _
        // Predicated region
        $region17: #{tpu_custom_call.1} parent=11 // pred_check
          %p213 = pneg %p91
        $region18: #{tpu_custom_call.1} parent=11 // pred_check_branch
          %215 = sbr.rel (%p213) target = $region20
        $region19: #{tpu_custom_call.1} parent=11 // pred_region
          _
        $region20: #{tpu_custom_call.1} parent=11 // pred_fallthru
          _
        // Predicated region
        $region21: #{tpu_custom_call.1} parent=11 // pred_check
          %p216 = pneg %p112
        $region22: #{tpu_custom_call.1} parent=11 // pred_check_branch
          %218 = sbr.rel (%p216) target = $region24
        $region23: #{tpu_custom_call.1} parent=11 // pred_region
          %s220 = ssub.s32 2048, 2048
          %221 = vsyncadd [#allocation6], %s220
          %s222 = sshll.u32 [#allocation7], 4
          %s223 = int_to_ptr.vmem [resolvable:$true] %s222
          %228 = dma.hbm_to_vmem [thread:$0]  %s3, 2048, %s223, [#allocation6], 128, 128, 8
        $region24: #{tpu_custom_call.1} parent=11 // pred_fallthru
          _
        // Predicated region
        $region25: #{tpu_custom_call.1} parent=11 // pred_check
          %p229 = pneg %p133
        $region26: #{tpu_custom_call.1} parent=11 // pred_check_branch
          %231 = sbr.rel (%p229) target = $region28
        $region27: #{tpu_custom_call.1} parent=11 // pred_region
          _
        $region28: #{tpu_custom_call.1} parent=11 // pred_fallthru
          _
      $region12: #{tpu_custom_call.1} parent=5 // pred_fallthru
        _
      %p232 = scmp.lt.s32.totalorder %s23, 2
      // Predicated region
      $region29: #{tpu_custom_call.1} parent=5 // pred_check
        %p233 = pneg %p232
      $region30: #{tpu_custom_call.1} parent=5 // pred_check_branch
        %235 = sbr.rel (%p233) target = $region32
      $region31: #{tpu_custom_call.1} parent=5 // pred_region
        // Predicated region
        $region33: #{tpu_custom_call.1} parent=31 // pred_check
          %p236 = pneg %p43
        $region34: #{tpu_custom_call.1} parent=31 // pred_check_branch
          %238 = sbr.rel (%p236) target = $region36
        $region35: #{tpu_custom_call.1} parent=31 // pred_region
          %s239 = sand.u32 %s33, 1
          %s240 = scalar_lea.sflag [#allocation3], %s239
          %s241 = sand.u32 %s33, 1
          %s242 = smul.addr %s241, 16
          %s243 = scalar_lea.vmem [#allocation2], %s242
          %s244 = smul.u32 2, %s23
          %s245 = ssub.s32 3, %s244
          %p246 = scmp.lt.s32.totalorder %s245, 2
          %s247 = scalar_select %p246, %s245, 2
          %s248 = smul.u32 128, %s247
          %s250 = ssub.s32 256, %s248
          %251 = vsyncadd %s240, %s250
          %p252 = scmp.ne.s32.totalorder 0, %s248
          %s253 = smul.addr %s244, 128
          %s254 = scalar_lea.hbm %s0, %s253
          %s255 = smul.u32 8, %s247
          %s256 = sshll.u32 %s243, 4
          %s257 = int_to_ptr.vmem [resolvable:$true] %s256
          %s258 = sshll.u32 %s255, 4
          %262 = dma.hbm_to_vmem [thread:$0]  (%p252), %s254, %s258, %s257, %s240, 128, 128, 8
        $region36: #{tpu_custom_call.1} parent=31 // pred_fallthru
          _
      $region32: #{tpu_custom_call.1} parent=5 // pred_fallthru
        _
      %p263 = scmp.le.s32.totalorder 1, %s23
      %p264 = scmp.lt.s32.totalorder %s23, 3
      %p265 = pnand %p263, %p264
      %p266 = pneg %p265
      // Predicated region
      $region37: #{tpu_custom_call.1} parent=5 // pred_check
        _
      $region38: #{tpu_custom_call.1} parent=5 // pred_check_branch
        %268 = sbr.rel (%p265) target = $region40
      $region39: #{tpu_custom_call.1} parent=5 // pred_region
        %s269 = ssub.s32 %s23, 1
        %s270 = sand.u32 %s36, 1
        %s271 = scalar_lea.sflag [#allocation3], %s270
        %s272 = sand.u32 %s36, 1
        %s273 = smul.addr %s272, 16
        %s274 = scalar_lea.vmem [#allocation2], %s273
        // Predicated region
        $region41: #{tpu_custom_call.1} parent=39 // pred_check
          %p275 = pneg %p49
        $region42: #{tpu_custom_call.1} parent=39 // pred_check_branch
          %277 = sbr.rel (%p275) target = $region44
        $region43: #{tpu_custom_call.1} parent=39 // pred_region
          %278 = dma.done %s271, 256
        $region44: #{tpu_custom_call.1} parent=39 // pred_fallthru
          _
        // Predicated region
        $region45: #{tpu_custom_call.1} parent=39 // pred_check
          %p279 = pneg %p70
        $region46: #{tpu_custom_call.1} parent=39 // pred_check_branch
          %281 = sbr.rel (%p279) target = $region48
        $region47: #{tpu_custom_call.1} parent=39 // pred_region
          %282 = dma.done [#allocation6], 1024
        $region48: #{tpu_custom_call.1} parent=39 // pred_fallthru
          _
        // Predicated region
        $region49: #{tpu_custom_call.1} parent=39 // pred_check
          %p283 = pneg %p112
        $region50: #{tpu_custom_call.1} parent=39 // pred_check_branch
          %285 = sbr.rel (%p283) target = $region52
        $region51: #{tpu_custom_call.1} parent=39 // pred_region
          %286 = dma.done [#allocation6], 2048
        $region52: #{tpu_custom_call.1} parent=39 // pred_fallthru
          _
        %s287 = sand.u32 %s36, 1
        %s288 = scalar_lea.sflag [#allocation3], %s287
        %s289 = sand.u32 %s36, 1
        %s290 = smul.addr %s289, 16
        %s291 = scalar_lea.vmem [#allocation2], %s290
        %p292 = pneg %p49
        %p293 = pneg %p46
        %p294 = pneg %p70
        %p295 = pneg %p67
        %p296 = pneg %p91
        %p297 = pneg %p88
        %p298 = pneg %p112
        %p299 = pneg %p109
        %p300 = pneg %p133
        %p301 = pneg %p130
        %p302 = pneg %p159
        %p303 = pneg %p156
        %s304 = sand.u32 %s146, 1
        %s305 = scalar_lea.sflag [#allocation4], %s304
        %s306 = sand.u32 %s146, 1
        %s307 = smul.addr %s306, 16
        %s308 = scalar_lea.vmem [#allocation8], %s307
        %p309 = pneg %p185
        %p310 = pneg %p182
        %s311 = sand.u32 %s172, 1
        %s312 = scalar_lea.sflag [#allocation10], %s311
        %s313 = sand.u32 %s172, 1
        %s314 = smul.addr %s313, 16
        %s315 = scalar_lea.vmem [#allocation9], %s314
        %s316 = smul.u32 2, %s28
        %s317 = ssub.s32 3, %s316
        %p318 = scmp.lt.s32.totalorder %s317, 2
        %s319 = scalar_select %p318, %s317, 2
        %s320 = smul.u32 128, %s319
        %s321 = smul.u32 2, %s28
        %s322 = ssub.s32 3, %s321
        %p323 = scmp.lt.s32.totalorder %s322, 2
        %s324 = scalar_select %p323, %s322, 2
        %s325 = smul.u32 128, %s324
        %s326 = smul.u32 2, %s28
        %s327 = ssub.s32 3, %s326
        %p328 = scmp.lt.s32.totalorder %s327, 2
        %s329 = scalar_select %p328, %s327, 2
        %s330 = smul.u32 128, %s329
        %v331 = vld [vmem:[%s274] sm:$0xff]
        %v332 = vld [vmem:[%s274 + $0x8] sm:$0xff]
        %v333 = vld [vmem:[#allocation5] sm:$0xff]
        %v334 = vld [vmem:[#allocation5 + $0x8] sm:$0xff]
        %v335 = vld [vmem:[#allocation5 + $0x10] sm:$0xff]
        %v336 = vld [vmem:[#allocation5 + $0x18] sm:$0xff]
        %v337 = vld [vmem:[#allocation5 + $0x20] sm:$0xff]
        %v338 = vld [vmem:[#allocation5 + $0x28] sm:$0xff]
        %v339 = vld [vmem:[#allocation5 + $0x30] sm:$0xff]
        %v340 = vld [vmem:[#allocation5 + $0x38] sm:$0xff]
        %v341 = vld [vmem:[%s2] sm:$0x1]
        %v343 = vlaneseq
        %v344 = vshrl.u32 %v343, 7
        %v345 = vsub.s32 0, %v344
        %v346 = vrot.slane %v341, %v345
        %vm348 = vcmask 523264
        %v350 = vsel %vm348, %v331, 0
        %v353 = vsel %vm348, %v332, 0
        %355 = vmatprep.subr.mxu0 0.0
        %356 = vmatpush1.msra.mxu0 %v333
        %357 = vmatprep.subr.mxu0 0.0
        %358 = vmatpush1.msra.mxu0 %v334
        %359 = vmatprep.subr.mxu0 0.0
        %360 = vmatpush1.msra.mxu0 %v335
        %361 = vmatprep.subr.mxu0 0.0
        %362 = vmatpush1.msra.mxu0 %v336
        %363 = vmatprep.subr.mxu0 0.0
        %364 = vmatpush1.msra.mxu0 %v337
        %365 = vmatprep.subr.mxu0 0.0
        %366 = vmatpush1.msra.mxu0 %v338
        %367 = vmatprep.subr.mxu0 0.0
        %368 = vmatpush1.msra.mxu0 %v339
        %369 = vmatprep.subr.mxu0 0.0
        %370 = vmatpush1.msra.mxu0 %v340
        %371 = vmatprep.subr.mxu0 0.0
        %372 = vmatpush1.msra.mxu0 0.0
        %373 = vmatprep.subr.mxu0 0.0
        %374 = vmatpush1.msra.mxu0 0.0
        %375 = vmatprep.subr.mxu0 0.0
        %376 = vmatpush1.msra.mxu0 0.0
        %377 = vmatprep.subr.mxu0 0.0
        %378 = vmatpush1.msra.mxu0 0.0
        %379 = vmatprep.subr.mxu0 0.0
        %380 = vmatpush1.msra.mxu0 0.0
        %381 = vmatprep.subr.mxu0 0.0
        %382 = vmatpush1.msra.mxu0 0.0
        %383 = vmatprep.subr.mxu0 0.0
        %384 = vmatpush1.msra.mxu0 0.0
        %385 = vmatprep.subr.mxu0 0.0
        %386 = vmatpush1.msra.mxu0 0.0
        %387 = vmatprep.subr.mxu0 0.0
        %388 = vmatpush1.msra.mxu0 0.0
        %389 = vmatprep.subr.mxu0 0.0
        %390 = vmatpush1.msra.mxu0 0.0
        %391 = vmatprep.subr.mxu0 0.0
        %392 = vmatpush1.msra.mxu0 0.0
        %393 = vmatprep.subr.mxu0 0.0
        %394 = vmatpush1.msra.mxu0 0.0
        %395 = vmatprep.subr.mxu0 0.0
        %396 = vmatpush1.msra.mxu0 0.0
        %397 = vmatprep.subr.mxu0 0.0
        %398 = vmatpush1.msra.mxu0 0.0
        %399 = vmatprep.subr.mxu0 0.0
        %400 = vmatpush1.msra.mxu0 0.0
        %401 = vmatprep.subr.mxu0 0.0
        %402 = vmatpush1.msra.mxu0 0.0
        %403 = vmatprep.subr.mxu0 0.0
        %404 = vmatpush1.msra.mxu0 0.0
        %405 = vmatprep.subr.mxu0 0.0
        %406 = vmatpush1.msra.mxu0 0.0
        %407 = vmatprep.subr.mxu0 0.0
        %408 = vmatpush1.msra.mxu0 0.0
        %409 = vmatprep.subr.mxu0 0.0
        %410 = vmatpush1.msra.mxu0 0.0
        %411 = vmatprep.subr.mxu0 0.0
        %412 = vmatpush1.msra.mxu0 0.0
        %413 = vmatprep.subr.mxu0 0.0
        %414 = vmatpush1.msra.mxu0 0.0
        %415 = vmatprep.subr.mxu0 0.0
        %416 = vmatpush1.msra.mxu0 0.0
        %417 = vmatprep.subr.mxu0 0.0
        %418 = vmatpush1.msra.mxu0 0.0
        %419 = vmatprep.mubr.f32.mxu0 0.0
        %420 = vmatmul.mubr.f32.gmra.mrb[0].mxu0 %v350
        %v421 = vpop.f32.mrb[0].mxu0
        %v422 = vadd.f32 %v346, %v421
        %v423 = vpop.f32.mrb[0].mxu0
        %424 = vmatprep.mubr.f32.mxu0 0.0
        %425 = vmatmul.mubr.f32.gmra.mrb[0].mxu0 %v353
        %v426 = vpop.f32.mrb[0].mxu0
        %v427 = vadd.f32 %v346, %v426
        %v428 = vpop.f32.mrb[0].mxu0
        %429 = vdwg.mxu0
        %v430 = vsub.f32 0.0, %v422
        %v431 = vsub.f32 0.0, %v427
        %v432 = vmul.f32 %v430, 1.442695
        %v433 = vpow.pop %v432
        %v434 = vmul.f32 %v431, 1.442695
        %v435 = vpow.pop %v434
        %v436 = vadd.f32 %v433, 1.0
        %v437 = vadd.f32 %v435, 1.0
        %v438 = vrcp.pop %v436
        %v439 = vmul.f32 1.0, %v438
        %v440 = vrcp.pop %v437
        %v441 = vmul.f32 1.0, %v440
        %442 = vst [vmem:[%s308] sm:$0xff] %v439
        %443 = vst [vmem:[%s308 + $0x8] sm:$0xff] %v441
        %v444 = vld [vmem:[#allocation7] sm:$0xff]
        %v445 = vld [vmem:[#allocation7 + $0x8] sm:$0xff]
        %v446 = vld [vmem:[#allocation7 + $0x10] sm:$0xff]
        %v447 = vld [vmem:[#allocation7 + $0x18] sm:$0xff]
        %v448 = vld [vmem:[#allocation7 + $0x20] sm:$0xff]
        %v449 = vld [vmem:[#allocation7 + $0x28] sm:$0xff]
        %v450 = vld [vmem:[#allocation7 + $0x30] sm:$0xff]
        %v451 = vld [vmem:[#allocation7 + $0x38] sm:$0xff]
        %v452 = vld [vmem:[#allocation7 + $0x40] sm:$0xff]
        %v453 = vld [vmem:[#allocation7 + $0x48] sm:$0xff]
        %v454 = vld [vmem:[#allocation7 + $0x50] sm:$0xff]
        %v455 = vld [vmem:[#allocation7 + $0x58] sm:$0xff]
        %v456 = vld [vmem:[#allocation7 + $0x60] sm:$0xff]
        %v457 = vld [vmem:[#allocation7 + $0x68] sm:$0xff]
        %v458 = vld [vmem:[#allocation7 + $0x70] sm:$0xff]
        %v459 = vld [vmem:[#allocation7 + $0x78] sm:$0xff]
        %v460 = vld [vmem:[%s4] sm:$0x1]
        %v462 = vlaneseq
        %v463 = vshrl.u32 %v462, 7
        %v464 = vsub.s32 0, %v463
        %v465 = vrot.slane %v460, %v464
        %467 = vmatprep.subr.mxu0 0.0
        %468 = vmatpush1.msra.mxu0 %v444
        %469 = vmatprep.subr.mxu0 0.0
        %470 = vmatpush1.msra.mxu0 %v445
        %471 = vmatprep.subr.mxu0 0.0
        %472 = vmatpush1.msra.mxu0 %v446
        %473 = vmatprep.subr.mxu0 0.0
        %474 = vmatpush1.msra.mxu0 %v447
        %475 = vmatprep.subr.mxu0 0.0
        %476 = vmatpush1.msra.mxu0 %v448
        %477 = vmatprep.subr.mxu0 0.0
        %478 = vmatpush1.msra.mxu0 %v449
        %479 = vmatprep.subr.mxu0 0.0
        %480 = vmatpush1.msra.mxu0 %v450
        %481 = vmatprep.subr.mxu0 0.0
        %482 = vmatpush1.msra.mxu0 %v451
        %483 = vmatprep.subr.mxu0 0.0
        %484 = vmatpush1.msra.mxu0 %v452
        %485 = vmatprep.subr.mxu0 0.0
        %486 = vmatpush1.msra.mxu0 %v453
        %487 = vmatprep.subr.mxu0 0.0
        %488 = vmatpush1.msra.mxu0 %v454
        %489 = vmatprep.subr.mxu0 0.0
        %490 = vmatpush1.msra.mxu0 %v455
        %491 = vmatprep.subr.mxu0 0.0
        %492 = vmatpush1.msra.mxu0 %v456
        %493 = vmatprep.subr.mxu0 0.0
        %494 = vmatpush1.msra.mxu0 %v457
        %495 = vmatprep.subr.mxu0 0.0
        %496 = vmatpush1.msra.mxu0 %v458
        %497 = vmatprep.subr.mxu0 0.0
        %498 = vmatpush1.msra.mxu0 %v459
        %499 = vmatprep.subr.mxu0 0.0
        %500 = vmatpush1.msra.mxu0 0.0
        %501 = vmatprep.subr.mxu0 0.0
        %502 = vmatpush1.msra.mxu0 0.0
        %503 = vmatprep.subr.mxu0 0.0
        %504 = vmatpush1.msra.mxu0 0.0
        %505 = vmatprep.subr.mxu0 0.0
        %506 = vmatpush1.msra.mxu0 0.0
        %507 = vmatprep.subr.mxu0 0.0
        %508 = vmatpush1.msra.mxu0 0.0
        %509 = vmatprep.subr.mxu0 0.0
        %510 = vmatpush1.msra.mxu0 0.0
        %511 = vmatprep.subr.mxu0 0.0
        %512 = vmatpush1.msra.mxu0 0.0
        %513 = vmatprep.subr.mxu0 0.0
        %514 = vmatpush1.msra.mxu0 0.0
        %515 = vmatprep.subr.mxu0 0.0
        %516 = vmatpush1.msra.mxu0 0.0
        %517 = vmatprep.subr.mxu0 0.0
        %518 = vmatpush1.msra.mxu0 0.0
        %519 = vmatprep.subr.mxu0 0.0
        %520 = vmatpush1.msra.mxu0 0.0
        %521 = vmatprep.subr.mxu0 0.0
        %522 = vmatpush1.msra.mxu0 0.0
        %523 = vmatprep.subr.mxu0 0.0
        %524 = vmatpush1.msra.mxu0 0.0
        %525 = vmatprep.subr.mxu0 0.0
        %526 = vmatpush1.msra.mxu0 0.0
        %527 = vmatprep.subr.mxu0 0.0
        %528 = vmatpush1.msra.mxu0 0.0
        %529 = vmatprep.subr.mxu0 0.0
        %530 = vmatpush1.msra.mxu0 0.0
        %531 = vmatprep.mubr.f32.mxu0 0.0
        %532 = vmatmul.mubr.f32.gmra.mrb[0].mxu0 %v439
        %v533 = vpop.f32.mrb[0].mxu0
        %v534 = vadd.f32 %v465, %v533
        %v535 = vpop.f32.mrb[0].mxu0
        %536 = vmatprep.mubr.f32.mxu0 0.0
        %537 = vmatmul.mubr.f32.gmra.mrb[0].mxu0 %v441
        %v538 = vpop.f32.mrb[0].mxu0
        %v539 = vadd.f32 %v465, %v538
        %v540 = vpop.f32.mrb[0].mxu0
        %541 = vdwg.mxu0
        %542 = vst [vmem:[%s315] sm:$0xff] %v534
        %543 = vst [vmem:[%s315 + $0x8] sm:$0xff] %v539
        %s544 = sand.u32 %s146, 1
        %s545 = scalar_lea.sflag [#allocation4], %s544
        %s546 = sand.u32 %s146, 1
        %s547 = smul.addr %s546, 16
        %s548 = scalar_lea.vmem [#allocation8], %s547
        %s549 = sand.u32 %s172, 1
        %s550 = scalar_lea.sflag [#allocation10], %s549
        %s551 = sand.u32 %s172, 1
        %s552 = smul.addr %s551, 16
        %s553 = scalar_lea.vmem [#allocation9], %s552
        // Predicated region
        $region53: #{tpu_custom_call.1} parent=39 // pred_check
          %p554 = pneg %p156
        $region54: #{tpu_custom_call.1} parent=39 // pred_check_branch
          %556 = sbr.rel (%p554) target = $region56
        $region55: #{tpu_custom_call.1} parent=39 // pred_region
          %s557 = smul.u32 2, %s28
          %s558 = ssub.s32 3, %s557
          %p559 = scmp.lt.s32.totalorder %s558, 2
          %s560 = scalar_select %p559, %s558, 2
          %s561 = smul.u32 128, %s560
          %s563 = ssub.s32 256, %s561
          %564 = vsyncadd %s545, %s563
          %p565 = scmp.ne.s32.totalorder 0, %s561
          %s566 = smul.addr %s557, 128
          %s567 = scalar_lea.hbm %s5, %s566
          %s568 = smul.u32 8, %s560
          %s569 = sshll.u32 %s548, 4
          %s570 = int_to_ptr.vmem [resolvable:$true] %s569
          %s571 = sshll.u32 %s568, 4
          %575 = dma.vmem_to_hbm [thread:$0]  (%p565), %s570, %s571, %s567, %s545, 128, 128, 8
        $region56: #{tpu_custom_call.1} parent=39 // pred_fallthru
          _
        // Predicated region
        $region57: #{tpu_custom_call.1} parent=39 // pred_check
          %p576 = pneg %p182
        $region58: #{tpu_custom_call.1} parent=39 // pred_check_branch
          %578 = sbr.rel (%p576) target = $region60
        $region59: #{tpu_custom_call.1} parent=39 // pred_region
          %s579 = smul.u32 2, %s28
          %s580 = ssub.s32 3, %s579
          %p581 = scmp.lt.s32.totalorder %s580, 2
          %s582 = scalar_select %p581, %s580, 2
          %s583 = smul.u32 128, %s582
          %s585 = ssub.s32 256, %s583
          %586 = vsyncadd %s550, %s585
          %p587 = scmp.ne.s32.totalorder 0, %s583
          %s588 = smul.addr %s579, 128
          %s589 = scalar_lea.hbm %s6, %s588
          %s590 = smul.u32 8, %s582
          %s591 = sshll.u32 %s553, 4
          %s592 = int_to_ptr.vmem [resolvable:$true] %s591
          %s593 = sshll.u32 %s590, 4
          %597 = dma.vmem_to_hbm [thread:$0]  (%p587), %s592, %s593, %s589, %s550, 128, 128, 8
        $region60: #{tpu_custom_call.1} parent=39 // pred_fallthru
          _
      $region40: #{tpu_custom_call.1} parent=5 // pred_fallthru
        _
      %p598 = scmp.le.s32.totalorder 2, %s23
      // Predicated region
      $region61: #{tpu_custom_call.1} parent=5 // pred_check
        %p599 = pneg %p598
      $region62: #{tpu_custom_call.1} parent=5 // pred_check_branch
        %601 = sbr.rel (%p599) target = $region64
      $region63: #{tpu_custom_call.1} parent=5 // pred_region
        %s602 = ssub.s32 %s23, 2
        // Predicated region
        $region65: #{tpu_custom_call.1} parent=63 // pred_check
          %p603 = pneg %p162
        $region66: #{tpu_custom_call.1} parent=63 // pred_check_branch
          %605 = sbr.rel (%p603) target = $region68
        $region67: #{tpu_custom_call.1} parent=63 // pred_region
          %s606 = sand.u32 %s147, 1
          %s607 = scalar_lea.sflag [#allocation4], %s606
          %s608 = sand.u32 %s147, 1
          %s609 = smul.addr %s608, 16
          %s610 = scalar_lea.vmem [#allocation8], %s609
          %611 = dma.done %s607, 256
        $region68: #{tpu_custom_call.1} parent=63 // pred_fallthru
          _
        // Predicated region
        $region69: #{tpu_custom_call.1} parent=63 // pred_check
          %p612 = pneg %p188
        $region70: #{tpu_custom_call.1} parent=63 // pred_check_branch
          %614 = sbr.rel (%p612) target = $region72
        $region71: #{tpu_custom_call.1} parent=63 // pred_region
          %s615 = sand.u32 %s173, 1
          %s616 = scalar_lea.sflag [#allocation10], %s615
          %s617 = sand.u32 %s173, 1
          %s618 = smul.addr %s617, 16
          %s619 = scalar_lea.vmem [#allocation9], %s618
          %620 = dma.done %s616, 256
        $region72: #{tpu_custom_call.1} parent=63 // pred_fallthru
          _
      $region64: #{tpu_custom_call.1} parent=5 // pred_fallthru
        _
    $region6: #{tpu_custom_call.1} parent=1 // loop_footer
      %s27 = sadd.s32 1, %s23
    $region7: #{tpu_custom_call.1} parent=1 // loop_footer_branch
      %22 = sbr.rel target = $region3
    $region8: #{tpu_custom_call.1} parent=1 // loop_exit
      _
    %621 = vsyncpa [#allocation3], 1
    %s622 = scalar_lea.sflag [#allocation3], 1
    %623 = vsyncpa %s622, 1
    %624 = vsyncpa [#allocation6], 1
    %625 = vsyncpa [#allocation4], 1
    %s626 = scalar_lea.sflag [#allocation4], 1
    %627 = vsyncpa %s626, 1
    %628 = vsyncpa [#allocation10], 1
    %s629 = scalar_lea.sflag [#allocation10], 1
    %630 = vsyncpa %s629, 1

// kernel: tpu_custom_call.1
$region0: #{tpu_custom_call.1}
  #allocation0 [shape = 'u32[]', space=smem, size = 0x4, offset = 0x4, fixed_abs, tag = 'smem constant byte address 0x4 - core index']
  #allocation1 [shape = 'u32[144,128]{1,0:T(1,128)}', space=vmem, size = 0x12000, scoped, tag = 'internal scratch']
  %s0 = inlined_call_operand.hbm [shape: f32[20,64], index: 0, kind: input, shape index: {}]
  %s1 = inlined_call_operand.hbm [shape: f32[64,128], index: 1, kind: input, shape index: {}]
  %s2 = inlined_call_operand.vmem [shape: f32[1,128], index: 2, kind: input, shape index: {}]
  %s3 = inlined_call_operand.hbm [shape: f32[128,128], index: 3, kind: input, shape index: {}]
  %s4 = inlined_call_operand.vmem [shape: f32[1,128], index: 4, kind: input, shape index: {}]
  %s5 = inlined_call_operand.hbm [shape: f32[20,128], index: 5, kind: output, shape index: {0}]
  %s6 = inlined_call_operand.hbm [shape: f32[20,128], index: 6, kind: output, shape index: {1}]
  %7 = xla_tuple %s5, %s6
  %s8 = sld [smem:[#allocation0]]
  $region73: #{tpu_custom_call.1} parent=0
    _
  %s10 = ssub.s32 1, %s8
  %s11 = scalar_select 0, %s10, %s8
  $region1: #{tpu_custom_call.1} parent=0
    #allocation2 [shape = 'u8[16384]{0}', space=vmem, size = 0x4000, scoped, tag = 'input window, operand 0']
    #allocation3 [shape = 's32[2]{0}', space=sflag, size = 0x8, scoped, tag = 'scoped memory for tpu_custom_call.1']
    #allocation4 [shape = 's32[2]{0}', space=sflag, size = 0x8, scoped, tag = 'scoped memory for tpu_custom_call.1']
    #allocation5 [shape = 'u8[32768]{0}', space=vmem, size = 0x8000, scoped, tag = 'input window, operand 1, single buffered']
    #allocation6 [shape = 's32[1]{0}', space=sflag, size = 0x4, scoped, tag = 'scoped memory for tpu_custom_call.1']
    #allocation7 [shape = 'u8[65536]{0}', space=vmem, size = 0x10000, scoped, tag = 'input window, operand 3, single buffered']
    #allocation8 [shape = 'u8[16384]{0}', space=vmem, size = 0x4000, scoped, tag = 'output window, operand 0']
    #allocation9 [shape = 'u8[16384]{0}', space=vmem, size = 0x4000, scoped, tag = 'output window, operand 1']
    #allocation10 [shape = 's32[2]{0}', space=sflag, size = 0x8, scoped, tag = 'scoped memory for tpu_custom_call.1']
    %12 = vsyncpa [#allocation3], 0
    %s13 = scalar_lea.sflag [#allocation3], 1
    %14 = vsyncpa %s13, 0
    %15 = vsyncpa [#allocation6], 0
    %16 = vsyncpa [#allocation4], 0
    %s17 = scalar_lea.sflag [#allocation4], 1
    %18 = vsyncpa %s17, 0
    %19 = vsyncpa [#allocation10], 0
    %s20 = scalar_lea.sflag [#allocation10], 1
    %21 = vsyncpa %s20, 0
    loop: start=0, step=1, limit=4
    $region2: #{tpu_custom_call.1} parent=1 // loop_pre_header
      _
    $region3: #{tpu_custom_call.1} parent=1 // loop_header
      %s23 = sphi 0, %s27
      %p24 = scmp.ge.s32.totalorder %s23, 4
      %s33 = sphi 0, %s35
      %s36 = sphi 0, %s33
      %s37 = sphi 0, %s36
      %s53 = sphi 0, %s37
      %s57 = sphi 0, %s57
      %s59 = sphi 0, %s57
      %s60 = sphi 0, %s59
      %s74 = sphi 0, %s60
      %s78 = sphi 0, %s78
      %s80 = sphi 0, %s78
      %s81 = sphi 0, %s80
      %s95 = sphi 0, %s81
      %s99 = sphi 0, %s99
      %s101 = sphi 0, %s99
      %s102 = sphi 0, %s101
      %s116 = sphi 0, %s102
      %s120 = sphi 0, %s120
      %s122 = sphi 0, %s120
      %s123 = sphi 0, %s122
      %s137 = sphi 0, %s123
      %s143 = sphi 0, %s145
      %s146 = sphi 0, %s143
      %s147 = sphi 0, %s146
      %s163 = sphi 0, %s147
      %s169 = sphi 0, %s171
      %s172 = sphi 0, %s169
      %s173 = sphi 0, %s172
      %s189 = sphi 0, %s173
    $region4: #{tpu_custom_call.1} parent=1 // loop_header_branch
      %26 = sbr.rel (%p24) target = $region8
    $region5: #{tpu_custom_call.1} parent=1 // loop_body
      %s28 = ssub.s32 %s23, 1
      %s29 = ssub.s32 %s23, 2
      %s30 = sadd.s32 %s23, 1
      %s31 = ssub.s32 %s23, %s30
      %p32 = scmp.eq.s32.totalorder %s31, 0
      %s34 = sadd.s32 %s33, 1
      %s35 = scalar_select %p32, %s33, %s34
      %p38 = pneg %p32
      %p39 = scmp.eq.s32.totalorder %s23, 1
      %p40 = por %p38, %p39
      %p41 = scmp.ne.s32.totalorder %s33, %s36
      %p42 = scmp.eq.s32.totalorder %s23, 0
      %p43 = por %p41, %p42
      %p44 = scmp.ne.s32.totalorder %s33, %s36
      %p45 = scmp.eq.s32.totalorder %s28, 1
      %p46 = por %p44, %p45
      %p47 = scmp.ne.s32.totalorder %s36, %s37
      %p48 = scmp.eq.s32.totalorder %s28, 0
      %p49 = por %p47, %p48
      %p50 = scmp.ne.s32.totalorder %s36, %s37
      %p51 = scmp.eq.s32.totalorder %s29, 1
      %p52 = por %p50, %p51
      %p54 = scmp.ne.s32.totalorder %s37, %s53
      %p55 = scmp.eq.s32.totalorder %s29, 0
      %p56 = por %p54, %p55
      %s58 = sadd.s32 %s57, 1
      %p61 = scmp.eq.s32.totalorder %s23, 1
      %p62 = scmp.ne.s32.totalorder %s57, %s59
      %p63 = scmp.eq.s32.totalorder %s23, 0
      %p64 = por %p62, %p63
      %p65 = scmp.ne.s32.totalorder %s57, %s59
      %p66 = scmp.eq.s32.totalorder %s28, 1
      %p67 = por %p65, %p66
      %p68 = scmp.ne.s32.totalorder %s59, %s60
      %p69 = scmp.eq.s32.totalorder %s28, 0
      %p70 = por %p68, %p69
      %p71 = scmp.ne.s32.totalorder %s59, %s60
      %p72 = scmp.eq.s32.totalorder %s29, 1
      %p73 = por %p71, %p72
      %p75 = scmp.ne.s32.totalorder %s60, %s74
      %p76 = scmp.eq.s32.totalorder %s29, 0
      %p77 = por %p75, %p76
      %s79 = sadd.s32 %s78, 1
      %p82 = scmp.eq.s32.totalorder %s23, 1
      %p83 = scmp.ne.s32.totalorder %s78, %s80
      %p84 = scmp.eq.s32.totalorder %s23, 0
      %p85 = por %p83, %p84
      %p86 = scmp.ne.s32.totalorder %s78, %s80
      %p87 = scmp.eq.s32.totalorder %s28, 1
      %p88 = por %p86, %p87
      %p89 = scmp.ne.s32.totalorder %s80, %s81
      %p90 = scmp.eq.s32.totalorder %s28, 0
      %p91 = por %p89, %p90
      %p92 = scmp.ne.s32.totalorder %s80, %s81
      %p93 = scmp.eq.s32.totalorder %s29, 1
      %p94 = por %p92, %p93
      %p96 = scmp.ne.s32.totalorder %s81, %s95
      %p97 = scmp.eq.s32.totalorder %s29, 0
      %p98 = por %p96, %p97
      %s100 = sadd.s32 %s99, 1
      %p103 = scmp.eq.s32.totalorder %s23, 1
      %p104 = scmp.ne.s32.totalorder %s99, %s101
      %p105 = scmp.eq.s32.totalorder %s23, 0
      %p106 = por %p104, %p105
      %p107 = scmp.ne.s32.totalorder %s99, %s101
      %p108 = scmp.eq.s32.totalorder %s28, 1
      %p109 = por %p107, %p108
      %p110 = scmp.ne.s32.totalorder %s101, %s102
      %p111 = scmp.eq.s32.totalorder %s28, 0
      %p112 = por %p110, %p111
      %p113 = scmp.ne.s32.totalorder %s101, %s102
      %p114 = scmp.eq.s32.totalorder %s29, 1
      %p115 = por %p113, %p114
      %p117 = scmp.ne.s32.totalorder %s102, %s116
      %p118 = scmp.eq.s32.totalorder %s29, 0
      %p119 = por %p117, %p118
      %s121 = sadd.s32 %s120, 1
      %p124 = scmp.eq.s32.totalorder %s23, 1
      %p125 = scmp.ne.s32.totalorder %s120, %s122
      %p126 = scmp.eq.s32.totalorder %s23, 0
      %p127 = por %p125, %p126
      %p128 = scmp.ne.s32.totalorder %s120, %s122
      %p129 = scmp.eq.s32.totalorder %s28, 1
      %p130 = por %p128, %p129
      %p131 = scmp.ne.s32.totalorder %s122, %s123
      %p132 = scmp.eq.s32.totalorder %s28, 0
      %p133 = por %p131, %p132
      %p134 = scmp.ne.s32.totalorder %s122, %s123
      %p135 = scmp.eq.s32.totalorder %s29, 1
      %p136 = por %p134, %p135
      %p138 = scmp.ne.s32.totalorder %s123, %s137
      %p139 = scmp.eq.s32.totalorder %s29, 0
      %p140 = por %p138, %p139
      %s141 = ssub.s32 %s23, %s30
      %p142 = scmp.eq.s32.totalorder %s141, 0
      %s144 = sadd.s32 %s143, 1
      %s145 = scalar_select %p142, %s143, %s144
      %p148 = pneg %p142
      %p149 = scmp.eq.s32.totalorder %s23, 1
      %p150 = por %p148, %p149
      %p151 = scmp.ne.s32.totalorder %s143, %s146
      %p152 = scmp.eq.s32.totalorder %s23, 0
      %p153 = por %p151, %p152
      %p154 = scmp.ne.s32.totalorder %s143, %s146
      %p155 = scmp.eq.s32.totalorder %s28, 1
      %p156 = por %p154, %p155
      %p157 = scmp.ne.s32.totalorder %s146, %s147
      %p158 = scmp.eq.s32.totalorder %s28, 0
      %p159 = por %p157, %p158
      %p160 = scmp.ne.s32.totalorder %s146, %s147
      %p161 = scmp.eq.s32.totalorder %s29, 1
      %p162 = por %p160, %p161
      %p164 = scmp.ne.s32.totalorder %s147, %s163
      %p165 = scmp.eq.s32.totalorder %s29, 0
      %p166 = por %p164, %p165
      %s167 = ssub.s32 %s23, %s30
      %p168 = scmp.eq.s32.totalorder %s167, 0
      %s170 = sadd.s32 %s169, 1
      %s171 = scalar_select %p168, %s169, %s170
      %p174 = pneg %p168
      %p175 = scmp.eq.s32.totalorder %s23, 1
      %p176 = por %p174, %p175
      %p177 = scmp.ne.s32.totalorder %s169, %s172
      %p178 = scmp.eq.s32.totalorder %s23, 0
      %p179 = por %p177, %p178
      %p180 = scmp.ne.s32.totalorder %s169, %s172
      %p181 = scmp.eq.s32.totalorder %s28, 1
      %p182 = por %p180, %p181
      %p183 = scmp.ne.s32.totalorder %s172, %s173
      %p184 = scmp.eq.s32.totalorder %s28, 0
      %p185 = por %p183, %p184
      %p186 = scmp.ne.s32.totalorder %s172, %s173
      %p187 = scmp.eq.s32.totalorder %s29, 1
      %p188 = por %p186, %p187
      %p190 = scmp.ne.s32.totalorder %s173, %s189
      %p191 = scmp.eq.s32.totalorder %s29, 0
      %p192 = por %p190, %p191
      %p193 = scmp.le.s32.totalorder 1, %s23
      %p194 = scmp.lt.s32.totalorder %s23, 3
      %p195 = pnand %p193, %p194
      %p196 = pneg %p195
      // Predicated region
      $region9: #{tpu_custom_call.1} parent=5 // pred_check
        _
      $region10: #{tpu_custom_call.1} parent=5 // pred_check_branch
        %198 = sbr.rel (%p195) target = $region12
      $region11: #{tpu_custom_call.1} parent=5 // pred_region
        %s199 = ssub.s32 %s23, 1
        // Predicated region
        $region13: #{tpu_custom_call.1} parent=11 // pred_check
          %p200 = pneg %p70
        $region14: #{tpu_custom_call.1} parent=11 // pred_check_branch
          %202 = sbr.rel (%p200) target = $region16
        $region15: #{tpu_custom_call.1} parent=11 // pred_region
          %s204 = ssub.s32 1024, 1024
          %205 = vsyncadd [#allocation6], %s204
          %s206 = sshll.u32 [#allocation5], 4
          %s207 = int_to_ptr.vmem [resolvable:$true] %s206
          %212 = dma.hbm_to_vmem [thread:$0]  %s1, 1024, %s207, [#allocation6], 128, 128, 8
        $region16: #{tpu_custom_call.1} parent=11 // pred_fallthru
          _
        // Predicated region
        $region17: #{tpu_custom_call.1} parent=11 // pred_check
          %p213 = pneg %p91
        $region18: #{tpu_custom_call.1} parent=11 // pred_check_branch
          %215 = sbr.rel (%p213) target = $region20
        $region19: #{tpu_custom_call.1} parent=11 // pred_region
          _
        $region20: #{tpu_custom_call.1} parent=11 // pred_fallthru
          _
        // Predicated region
        $region21: #{tpu_custom_call.1} parent=11 // pred_check
          %p216 = pneg %p112
        $region22: #{tpu_custom_call.1} parent=11 // pred_check_branch
          %218 = sbr.rel (%p216) target = $region24
        $region23: #{tpu_custom_call.1} parent=11 // pred_region
          %s220 = ssub.s32 2048, 2048
          %221 = vsyncadd [#allocation6], %s220
          %s222 = sshll.u32 [#allocation7], 4
          %s223 = int_to_ptr.vmem [resolvable:$true] %s222
          %228 = dma.hbm_to_vmem [thread:$0]  %s3, 2048, %s223, [#allocation6], 128, 128, 8
        $region24: #{tpu_custom_call.1} parent=11 // pred_fallthru
          _
        // Predicated region
        $region25: #{tpu_custom_call.1} parent=11 // pred_check
          %p229 = pneg %p133
        $region26: #{tpu_custom_call.1} parent=11 // pred_check_branch
          %231 = sbr.rel (%p229) target = $region28
        $region27: #{tpu_custom_call.1} parent=11 // pred_region
          _
        $region28: #{tpu_custom_call.1} parent=11 // pred_fallthru
          _
      $region12: #{tpu_custom_call.1} parent=5 // pred_fallthru
        _
      %p232 = scmp.lt.s32.totalorder %s23, 2
      // Predicated region
      $region29: #{tpu_custom_call.1} parent=5 // pred_check
        %p233 = pneg %p232
      $region30: #{tpu_custom_call.1} parent=5 // pred_check_branch
        %235 = sbr.rel (%p233) target = $region32
      $region31: #{tpu_custom_call.1} parent=5 // pred_region
        // Predicated region
        $region33: #{tpu_custom_call.1} parent=31 // pred_check
          %p236 = pneg %p43
        $region34: #{tpu_custom_call.1} parent=31 // pred_check_branch
          %238 = sbr.rel (%p236) target = $region36
        $region35: #{tpu_custom_call.1} parent=31 // pred_region
          %s239 = sand.u32 %s33, 1
          %s240 = scalar_lea.sflag [#allocation3], %s239
          %s241 = sand.u32 %s33, 1
          %s242 = smul.addr %s241, 16
          %s243 = scalar_lea.vmem [#allocation2], %s242
          %s244 = smul.u32 2, %s23
          %s245 = ssub.s32 3, %s244
          %p246 = scmp.lt.s32.totalorder %s245, 2
          %s247 = scalar_select %p246, %s245, 2
          %s248 = smul.u32 128, %s247
          %s250 = ssub.s32 256, %s248
          %251 = vsyncadd %s240, %s250
          %p252 = scmp.ne.s32.totalorder 0, %s248
          %s253 = smul.addr %s244, 128
          %s254 = scalar_lea.hbm %s0, %s253
          %s255 = smul.u32 8, %s247
          %s256 = sshll.u32 %s243, 4
          %s257 = int_to_ptr.vmem [resolvable:$true] %s256
          %s258 = sshll.u32 %s255, 4
          %262 = dma.hbm_to_vmem [thread:$0]  (%p252), %s254, %s258, %s257, %s240, 128, 128, 8
        $region36: #{tpu_custom_call.1} parent=31 // pred_fallthru
          _
      $region32: #{tpu_custom_call.1} parent=5 // pred_fallthru
        _
      %p263 = scmp.le.s32.totalorder 1, %s23
      %p264 = scmp.lt.s32.totalorder %s23, 3
      %p265 = pnand %p263, %p264
      %p266 = pneg %p265
      // Predicated region
      $region37: #{tpu_custom_call.1} parent=5 // pred_check
        _
      $region38: #{tpu_custom_call.1} parent=5 // pred_check_branch
        %268 = sbr.rel (%p265) target = $region40
      $region39: #{tpu_custom_call.1} parent=5 // pred_region
        %s269 = ssub.s32 %s23, 1
        %s270 = sand.u32 %s36, 1
        %s271 = scalar_lea.sflag [#allocation3], %s270
        %s272 = sand.u32 %s36, 1
        %s273 = smul.addr %s272, 16
        %s274 = scalar_lea.vmem [#allocation2], %s273
        // Predicated region
        $region41: #{tpu_custom_call.1} parent=39 // pred_check
          %p275 = pneg %p49
        $region42: #{tpu_custom_call.1} parent=39 // pred_check_branch
          %277 = sbr.rel (%p275) target = $region44
        $region43: #{tpu_custom_call.1} parent=39 // pred_region
          %278 = dma.done %s271, 256
        $region44: #{tpu_custom_call.1} parent=39 // pred_fallthru
          _
        // Predicated region
        $region45: #{tpu_custom_call.1} parent=39 // pred_check
          %p279 = pneg %p70
        $region46: #{tpu_custom_call.1} parent=39 // pred_check_branch
          %281 = sbr.rel (%p279) target = $region48
        $region47: #{tpu_custom_call.1} parent=39 // pred_region
          %282 = dma.done [#allocation6], 1024
        $region48: #{tpu_custom_call.1} parent=39 // pred_fallthru
          _
        // Predicated region
        $region49: #{tpu_custom_call.1} parent=39 // pred_check
          %p283 = pneg %p112
        $region50: #{tpu_custom_call.1} parent=39 // pred_check_branch
          %285 = sbr.rel (%p283) target = $region52
        $region51: #{tpu_custom_call.1} parent=39 // pred_region
          %286 = dma.done [#allocation6], 2048
        $region52: #{tpu_custom_call.1} parent=39 // pred_fallthru
          _
        %s287 = sand.u32 %s36, 1
        %s288 = scalar_lea.sflag [#allocation3], %s287
        %s289 = sand.u32 %s36, 1
        %s290 = smul.addr %s289, 16
        %s291 = scalar_lea.vmem [#allocation2], %s290
        %p292 = pneg %p49
        %p293 = pneg %p46
        %p294 = pneg %p70
        %p295 = pneg %p67
        %p296 = pneg %p91
        %p297 = pneg %p88
        %p298 = pneg %p112
        %p299 = pneg %p109
        %p300 = pneg %p133
        %p301 = pneg %p130
        %p302 = pneg %p159
        %p303 = pneg %p156
        %s304 = sand.u32 %s146, 1
        %s305 = scalar_lea.sflag [#allocation4], %s304
        %s306 = sand.u32 %s146, 1
        %s307 = smul.addr %s306, 16
        %s308 = scalar_lea.vmem [#allocation8], %s307
        %p309 = pneg %p185
        %p310 = pneg %p182
        %s311 = sand.u32 %s172, 1
        %s312 = scalar_lea.sflag [#allocation10], %s311
        %s313 = sand.u32 %s172, 1
        %s314 = smul.addr %s313, 16
        %s315 = scalar_lea.vmem [#allocation9], %s314
        %s316 = smul.u32 2, %s28
        %s317 = ssub.s32 3, %s316
        %p318 = scmp.lt.s32.totalorder %s317, 2
        %s319 = scalar_select %p318, %s317, 2
        %s320 = smul.u32 128, %s319
        %s321 = smul.u32 2, %s28
        %s322 = ssub.s32 3, %s321
        %p323 = scmp.lt.s32.totalorder %s322, 2
        %s324 = scalar_select %p323, %s322, 2
        %s325 = smul.u32 128, %s324
        %s326 = smul.u32 2, %s28
        %s327 = ssub.s32 3, %s326
        %p328 = scmp.lt.s32.totalorder %s327, 2
        %s329 = scalar_select %p328, %s327, 2
        %s330 = smul.u32 128, %s329
        %v331 = vld [vmem:[%s274] sm:$0xff]
        %v332 = vld [vmem:[%s274 + $0x8] sm:$0xff]
        %v333 = vld [vmem:[#allocation5] sm:$0xff]
        %v334 = vld [vmem:[#allocation5 + $0x8] sm:$0xff]
        %v335 = vld [vmem:[#allocation5 + $0x10] sm:$0xff]
        %v336 = vld [vmem:[#allocation5 + $0x18] sm:$0xff]
        %v337 = vld [vmem:[#allocation5 + $0x20] sm:$0xff]
        %v338 = vld [vmem:[#allocation5 + $0x28] sm:$0xff]
        %v339 = vld [vmem:[#allocation5 + $0x30] sm:$0xff]
        %v340 = vld [vmem:[#allocation5 + $0x38] sm:$0xff]
        %v341 = vld [vmem:[%s2] sm:$0x1]
        %v343 = vlaneseq
        %v344 = vshrl.u32 %v343, 7
        %v345 = vsub.s32 0, %v344
        %v346 = vrot.slane %v341, %v345
        %vm348 = vcmask 523264
        %v350 = vsel %vm348, %v331, 0
        %v353 = vsel %vm348, %v332, 0
        %355 = vmatprep.subr.mxu0 0.0
        %356 = vmatpush1.msra.mxu0 %v333
        %357 = vmatprep.subr.mxu0 0.0
        %358 = vmatpush1.msra.mxu0 %v334
        %359 = vmatprep.subr.mxu0 0.0
        %360 = vmatpush1.msra.mxu0 %v335
        %361 = vmatprep.subr.mxu0 0.0
        %362 = vmatpush1.msra.mxu0 %v336
        %363 = vmatprep.subr.mxu0 0.0
        %364 = vmatpush1.msra.mxu0 %v337
        %365 = vmatprep.subr.mxu0 0.0
        %366 = vmatpush1.msra.mxu0 %v338
        %367 = vmatprep.subr.mxu0 0.0
        %368 = vmatpush1.msra.mxu0 %v339
        %369 = vmatprep.subr.mxu0 0.0
        %370 = vmatpush1.msra.mxu0 %v340
        %371 = vmatprep.subr.mxu0 0.0
        %372 = vmatpush1.msra.mxu0 0.0
        %373 = vmatprep.subr.mxu0 0.0
        %374 = vmatpush1.msra.mxu0 0.0
        %375 = vmatprep.subr.mxu0 0.0
        %376 = vmatpush1.msra.mxu0 0.0
        %377 = vmatprep.subr.mxu0 0.0
        %378 = vmatpush1.msra.mxu0 0.0
        %379 = vmatprep.subr.mxu0 0.0
        %380 = vmatpush1.msra.mxu0 0.0
        %381 = vmatprep.subr.mxu0 0.0
        %382 = vmatpush1.msra.mxu0 0.0
        %383 = vmatprep.subr.mxu0 0.0
        %384 = vmatpush1.msra.mxu0 0.0
        %385 = vmatprep.subr.mxu0 0.0
        %386 = vmatpush1.msra.mxu0 0.0
        %387 = vmatprep.subr.mxu0 0.0
        %388 = vmatpush1.msra.mxu0 0.0
        %389 = vmatprep.subr.mxu0 0.0
        %390 = vmatpush1.msra.mxu0 0.0
        %391 = vmatprep.subr.mxu0 0.0
        %392 = vmatpush1.msra.mxu0 0.0
        %393 = vmatprep.subr.mxu0 0.0
        %394 = vmatpush1.msra.mxu0 0.0
        %395 = vmatprep.subr.mxu0 0.0
        %396 = vmatpush1.msra.mxu0 0.0
        %397 = vmatprep.subr.mxu0 0.0
        %398 = vmatpush1.msra.mxu0 0.0
        %399 = vmatprep.subr.mxu0 0.0
        %400 = vmatpush1.msra.mxu0 0.0
        %401 = vmatprep.subr.mxu0 0.0
        %402 = vmatpush1.msra.mxu0 0.0
        %403 = vmatprep.subr.mxu0 0.0
        %404 = vmatpush1.msra.mxu0 0.0
        %405 = vmatprep.subr.mxu0 0.0
        %406 = vmatpush1.msra.mxu0 0.0
        %407 = vmatprep.subr.mxu0 0.0
        %408 = vmatpush1.msra.mxu0 0.0
        %409 = vmatprep.subr.mxu0 0.0
        %410 = vmatpush1.msra.mxu0 0.0
        %411 = vmatprep.subr.mxu0 0.0
        %412 = vmatpush1.msra.mxu0 0.0
        %413 = vmatprep.subr.mxu0 0.0
        %414 = vmatpush1.msra.mxu0 0.0
        %415 = vmatprep.subr.mxu0 0.0
        %416 = vmatpush1.msra.mxu0 0.0
        %417 = vmatprep.subr.mxu0 0.0
        %418 = vmatpush1.msra.mxu0 0.0
        %419 = vmatprep.mubr.f32.mxu0 0.0
        %420 = vmatmul.mubr.f32.gmra.mrb[0].mxu0 %v350
        %v421 = vpop.f32.mrb[0].mxu0
        %v422 = vadd.f32 %v346, %v421
        %v423 = vpop.f32.mrb[0].mxu0
        %424 = vmatprep.mubr.f32.mxu0 0.0
        %425 = vmatmul.mubr.f32.gmra.mrb[0].mxu0 %v353
        %v426 = vpop.f32.mrb[0].mxu0
        %v427 = vadd.f32 %v346, %v426
        %v428 = vpop.f32.mrb[0].mxu0
        %429 = vdwg.mxu0
        %v430 = vsub.f32 0.0, %v422
        %v431 = vsub.f32 0.0, %v427
        %v432 = vmul.f32 %v430, 1.442695
        %v433 = vpow.pop %v432
        %v434 = vmul.f32 %v431, 1.442695
        %v435 = vpow.pop %v434
        %v436 = vadd.f32 %v433, 1.0
        %v437 = vadd.f32 %v435, 1.0
        %v438 = vrcp.pop %v436
        %v439 = vmul.f32 1.0, %v438
        %v440 = vrcp.pop %v437
        %v441 = vmul.f32 1.0, %v440
        %442 = vst [vmem:[%s308] sm:$0xff] %v439
        %443 = vst [vmem:[%s308 + $0x8] sm:$0xff] %v441
        %v444 = vld [vmem:[#allocation7] sm:$0xff]
        %v445 = vld [vmem:[#allocation7 + $0x8] sm:$0xff]
        %v446 = vld [vmem:[#allocation7 + $0x10] sm:$0xff]
        %v447 = vld [vmem:[#allocation7 + $0x18] sm:$0xff]
        %v448 = vld [vmem:[#allocation7 + $0x20] sm:$0xff]
        %v449 = vld [vmem:[#allocation7 + $0x28] sm:$0xff]
        %v450 = vld [vmem:[#allocation7 + $0x30] sm:$0xff]
        %v451 = vld [vmem:[#allocation7 + $0x38] sm:$0xff]
        %v452 = vld [vmem:[#allocation7 + $0x40] sm:$0xff]
        %v453 = vld [vmem:[#allocation7 + $0x48] sm:$0xff]
        %v454 = vld [vmem:[#allocation7 + $0x50] sm:$0xff]
        %v455 = vld [vmem:[#allocation7 + $0x58] sm:$0xff]
        %v456 = vld [vmem:[#allocation7 + $0x60] sm:$0xff]
        %v457 = vld [vmem:[#allocation7 + $0x68] sm:$0xff]
        %v458 = vld [vmem:[#allocation7 + $0x70] sm:$0xff]
        %v459 = vld [vmem:[#allocation7 + $0x78] sm:$0xff]
        %v460 = vld [vmem:[%s4] sm:$0x1]
        %v462 = vlaneseq
        %v463 = vshrl.u32 %v462, 7
        %v464 = vsub.s32 0, %v463
        %v465 = vrot.slane %v460, %v464
        %467 = vmatprep.subr.mxu0 0.0
        %468 = vmatpush1.msra.mxu0 %v444
        %469 = vmatprep.subr.mxu0 0.0
        %470 = vmatpush1.msra.mxu0 %v445
        %471 = vmatprep.subr.mxu0 0.0
        %472 = vmatpush1.msra.mxu0 %v446
        %473 = vmatprep.subr.mxu0 0.0
        %474 = vmatpush1.msra.mxu0 %v447
        %475 = vmatprep.subr.mxu0 0.0
        %476 = vmatpush1.msra.mxu0 %v448
        %477 = vmatprep.subr.mxu0 0.0
        %478 = vmatpush1.msra.mxu0 %v449
        %479 = vmatprep.subr.mxu0 0.0
        %480 = vmatpush1.msra.mxu0 %v450
        %481 = vmatprep.subr.mxu0 0.0
        %482 = vmatpush1.msra.mxu0 %v451
        %483 = vmatprep.subr.mxu0 0.0
        %484 = vmatpush1.msra.mxu0 %v452
        %485 = vmatprep.subr.mxu0 0.0
        %486 = vmatpush1.msra.mxu0 %v453
        %487 = vmatprep.subr.mxu0 0.0
        %488 = vmatpush1.msra.mxu0 %v454
        %489 = vmatprep.subr.mxu0 0.0
        %490 = vmatpush1.msra.mxu0 %v455
        %491 = vmatprep.subr.mxu0 0.0
        %492 = vmatpush1.msra.mxu0 %v456
        %493 = vmatprep.subr.mxu0 0.0
        %494 = vmatpush1.msra.mxu0 %v457
        %495 = vmatprep.subr.mxu0 0.0
        %496 = vmatpush1.msra.mxu0 %v458
        %497 = vmatprep.subr.mxu0 0.0
        %498 = vmatpush1.msra.mxu0 %v459
        %499 = vmatprep.subr.mxu0 0.0
        %500 = vmatpush1.msra.mxu0 0.0
        %501 = vmatprep.subr.mxu0 0.0
        %502 = vmatpush1.msra.mxu0 0.0
        %503 = vmatprep.subr.mxu0 0.0
        %504 = vmatpush1.msra.mxu0 0.0
        %505 = vmatprep.subr.mxu0 0.0
        %506 = vmatpush1.msra.mxu0 0.0
        %507 = vmatprep.subr.mxu0 0.0
        %508 = vmatpush1.msra.mxu0 0.0
        %509 = vmatprep.subr.mxu0 0.0
        %510 = vmatpush1.msra.mxu0 0.0
        %511 = vmatprep.subr.mxu0 0.0
        %512 = vmatpush1.msra.mxu0 0.0
        %513 = vmatprep.subr.mxu0 0.0
        %514 = vmatpush1.msra.mxu0 0.0
        %515 = vmatprep.subr.mxu0 0.0
        %516 = vmatpush1.msra.mxu0 0.0
        %517 = vmatprep.subr.mxu0 0.0
        %518 = vmatpush1.msra.mxu0 0.0
        %519 = vmatprep.subr.mxu0 0.0
        %520 = vmatpush1.msra.mxu0 0.0
        %521 = vmatprep.subr.mxu0 0.0
        %522 = vmatpush1.msra.mxu0 0.0
        %523 = vmatprep.subr.mxu0 0.0
        %524 = vmatpush1.msra.mxu0 0.0
        %525 = vmatprep.subr.mxu0 0.0
        %526 = vmatpush1.msra.mxu0 0.0
        %527 = vmatprep.subr.mxu0 0.0
        %528 = vmatpush1.msra.mxu0 0.0
        %529 = vmatprep.subr.mxu0 0.0
        %530 = vmatpush1.msra.mxu0 0.0
        %531 = vmatprep.mubr.f32.mxu0 0.0
        %532 = vmatmul.mubr.f32.gmra.mrb[0].mxu0 %v439
        %v533 = vpop.f32.mrb[0].mxu0
        %v534 = vadd.f32 %v465, %v533
        %v535 = vpop.f32.mrb[0].mxu0
        %536 = vmatprep.mubr.f32.mxu0 0.0
        %537 = vmatmul.mubr.f32.gmra.mrb[0].mxu0 %v441
        %v538 = vpop.f32.mrb[0].mxu0
        %v539 = vadd.f32 %v465, %v538
        %v540 = vpop.f32.mrb[0].mxu0
        %541 = vdwg.mxu0
        %542 = vst [vmem:[%s315] sm:$0xff] %v534
        %543 = vst [vmem:[%s315 + $0x8] sm:$0xff] %v539
        %s544 = sand.u32 %s146, 1
        %s545 = scalar_lea.sflag [#allocation4], %s544
        %s546 = sand.u32 %s146, 1
        %s547 = smul.addr %s546, 16
        %s548 = scalar_lea.vmem [#allocation8], %s547
        %s549 = sand.u32 %s172, 1
        %s550 = scalar_lea.sflag [#allocation10], %s549
        %s551 = sand.u32 %s172, 1
        %s552 = smul.addr %s551, 16
        %s553 = scalar_lea.vmem [#allocation9], %s552
        // Predicated region
        $region53: #{tpu_custom_call.1} parent=39 // pred_check
          %p554 = pneg %p156
        $region54: #{tpu_custom_call.1} parent=39 // pred_check_branch
          %556 = sbr.rel (%p554) target = $region56
        $region55: #{tpu_custom_call.1} parent=39 // pred_region
          %s557 = smul.u32 2, %s28
          %s558 = ssub.s32 3, %s557
          %p559 = scmp.lt.s32.totalorder %s558, 2
          %s560 = scalar_select %p559, %s558, 2
          %s561 = smul.u32 128, %s560
          %s563 = ssub.s32 256, %s561
          %564 = vsyncadd %s545, %s563
          %p565 = scmp.ne.s32.totalorder 0, %s561
          %s566 = smul.addr %s557, 128
          %s567 = scalar_lea.hbm %s5, %s566
          %s568 = smul.u32 8, %s560
          %s569 = sshll.u32 %s548, 4
          %s570 = int_to_ptr.vmem [resolvable:$true] %s569
          %s571 = sshll.u32 %s568, 4
          %575 = dma.vmem_to_hbm [thread:$0]  (%p565), %s570, %s571, %s567, %s545, 128, 128, 8
        $region56: #{tpu_custom_call.1} parent=39 // pred_fallthru
          _
        // Predicated region
        $region57: #{tpu_custom_call.1} parent=39 // pred_check
          %p576 = pneg %p182
        $region58: #{tpu_custom_call.1} parent=39 // pred_check_branch
          %578 = sbr.rel (%p576) target = $region60
        $region59: #{tpu_custom_call.1} parent=39 // pred_region
          %s579 = smul.u32 2, %s28
          %s580 = ssub.s32 3, %s579
          %p581 = scmp.lt.s32.totalorder %s580, 2
          %s582 = scalar_select %p581, %s580, 2
          %s583 = smul.u32 128, %s582
          %s585 = ssub.s32 256, %s583
          %586 = vsyncadd %s550, %s585
          %p587 = scmp.ne.s32.totalorder 0, %s583
          %s588 = smul.addr %s579, 128
          %s589 = scalar_lea.hbm %s6, %s588
          %s590 = smul.u32 8, %s582
          %s591 = sshll.u32 %s553, 4
          %s592 = int_to_ptr.vmem [resolvable:$true] %s591
          %s593 = sshll.u32 %s590, 4
          %597 = dma.vmem_to_hbm [thread:$0]  (%p587), %s592, %s593, %s589, %s550, 128, 128, 8
        $region60: #{tpu_custom_call.1} parent=39 // pred_fallthru
          _
      $region40: #{tpu_custom_call.1} parent=5 // pred_fallthru
        _
      %p598 = scmp.le.s32.totalorder 2, %s23
      // Predicated region
      $region61: #{tpu_custom_call.1} parent=5 // pred_check
        %p599 = pneg %p598
      $region62: #{tpu_custom_call.1} parent=5 // pred_check_branch
        %601 = sbr.rel (%p599) target = $region64
      $region63: #{tpu_custom_call.1} parent=5 // pred_region
        %s602 = ssub.s32 %s23, 2
        // Predicated region
        $region65: #{tpu_custom_call.1} parent=63 // pred_check
          %p603 = pneg %p162
        $region66: #{tpu_custom_call.1} parent=63 // pred_check_branch
          %605 = sbr.rel (%p603) target = $region68
        $region67: #{tpu_custom_call.1} parent=63 // pred_region
          %s606 = sand.u32 %s147, 1
          %s607 = scalar_lea.sflag [#allocation4], %s606
          %s608 = sand.u32 %s147, 1
          %s609 = smul.addr %s608, 16
          %s610 = scalar_lea.vmem [#allocation8], %s609
          %611 = dma.done %s607, 256
        $region68: #{tpu_custom_call.1} parent=63 // pred_fallthru
          _
        // Predicated region
        $region69: #{tpu_custom_call.1} parent=63 // pred_check
          %p612 = pneg %p188
        $region70: #{tpu_custom_call.1} parent=63 // pred_check_branch
          %614 = sbr.rel (%p612) target = $region72
        $region71: #{tpu_custom_call.1} parent=63 // pred_region
          %s615 = sand.u32 %s173, 1
          %s616 = scalar_lea.sflag [#allocation10], %s615
          %s617 = sand.u32 %s173, 1
          %s618 = smul.addr %s617, 16
          %s619 = scalar_lea.vmem [#allocation9], %s618
          %620 = dma.done %s616, 256
        $region72: #{tpu_custom_call.1} parent=63 // pred_fallthru
          _
      $region64: #{tpu_custom_call.1} parent=5 // pred_fallthru
        _
    $region6: #{tpu_custom_call.1} parent=1 // loop_footer
      %s27 = sadd.s32 1, %s23
    $region7: #{tpu_custom_call.1} parent=1 // loop_footer_branch
      %22 = sbr.rel target = $region3
    $region8: #{tpu_custom_call.1} parent=1 // loop_exit
      _
    %621 = vsyncpa [#allocation3], 1
    %s622 = scalar_lea.sflag [#allocation3], 1
    %623 = vsyncpa %s622, 1
    %624 = vsyncpa [#allocation6], 1
    %625 = vsyncpa [#allocation4], 1
    %s626 = scalar_lea.sflag [#allocation4], 1
    %627 = vsyncpa %s626, 1
    %628 = vsyncpa [#allocation10], 1
    %s629 = scalar_lea.sflag [#allocation10], 1
    %630 = vsyncpa %s629, 1

</llo_original>
